<compile_context>
chip_gen: v7x
topology: tpu7x:2x2x1
jax: 0.10.0
libtpu: 0.0.40
codegen_flags: <defaults>
</compile_context>

<pallas_src>
import functools
import math

import jax
import jax.numpy as jnp
from jax import lax
from jax.experimental import pallas as pl
from jax.experimental.pallas import tpu as pltpu

# Set to jnp.bfloat16 on v6e/v7x for full MXU rate (f32 accumulation is kept via
# preferred_element_type); left at f32 here so the check vs the f32 reference
# stays within tight tolerance.
COMPUTE_DTYPE = jnp.float32


# ---------------------------------------------------------------------------
# Fused kernel: QKV projection + per-head attention + out-proj + residual + LN
# ---------------------------------------------------------------------------
def fused_mha_kernel(x_ref, wqkv_ref, bqkv_ref, wo_ref, bo_ref, g_ref, beta_ref,
                     o_ref, qkv_s, qg_s, kg_s, vg_s, cg_s, ctx_s,
                     *, compute_dtype):
    S, E = x_ref.shape[1], x_ref.shape[2]
    dh = qg_s.shape[-1]
    H = E // dh
    rph = S // H            # rows of the (S, E) slab owned by each head
    cd = compute_dtype

    x = x_ref[0]            # (S, E)

    # 1) fused Q/K/V projection: one MXU matmul (scale already folded into the
    #    Q columns of wqkv / bqkv by the wrapper).
    qkv_s[...] = (jnp.dot(x.astype(cd), wqkv_ref[...].astype(cd),
                          preferred_element_type=jnp.float32)
                  + bqkv_ref[...])

    # 2) attention per head (H is small -> static unroll, all data stays in
    #    VMEM scratch; no HBM intermediates, no extra kernel launches).
    for h in range(H):
        r0 = h * rph
        # Gather this head's Q/K/V in "grouped" row order (i*rph + u), a
        # consistent permutation of the torch .view row order (u*H + i).
        for i in range(H):
            qg_s[i * rph:(i + 1) * rph, :] = qkv_s[r0:r0 + rph, i * dh:(i + 1) * dh]
            kg_s[i * rph:(i + 1) * rph, :] = qkv_s[r0:r0 + rph, E + i * dh:E + (i + 1) * dh]
            vg_s[i * rph:(i + 1) * rph, :] = qkv_s[r0:r0 + rph, 2 * E + i * dh:2 * E + (i + 1) * dh]

        q = qg_s[...]       # (S, dh)
        k = kg_s[...]       # (S, dh)
        v = vg_s[...]       # (S, dh)

        # scores = Q @ K^T without materializing a transpose (contract dim 1/1)
        s = lax.dot_general(q.astype(cd), k.astype(cd),
                            (((1,), (1,)), ((), ())),
                            preferred_element_type=jnp.float32)   # (S, S)

        # numerically-stable softmax (stats in f32); divide -> EUP reciprocal
        m = jnp.max(s, axis=-1, keepdims=True)
        p = jnp.exp(s - m)
        l = jnp.sum(p, axis=-1, keepdims=True)
        p = p * pl.reciprocal(l, approx=True)

        cg_s[...] = jnp.dot(p.astype(cd), v.astype(cd),
                            preferred_element_type=jnp.float32)   # (S, dh)

        # Scatter grouped context back into the (S, E) layout expected by the
        # output projection (inverse of the torch .view).
        for i in range(H):
            ctx_s[r0:r0 + rph, i * dh:(i + 1) * dh] = cg_s[i * rph:(i + 1) * rph, :]

    # 3) output projection + (dropout = identity) + residual + LayerNorm
    out = (jnp.dot(ctx_s[...].astype(cd), wo_ref[...].astype(cd),
                   preferred_element_type=jnp.float32)
           + bo_ref[...])
    # TODO(synk): nn.Dropout is identity here (p=0.0 / inference); no stochastic mask.
    out = out + x
    mean = jnp.mean(out, axis=-1, keepdims=True)
    var = jnp.mean(out * out, axis=-1, keepdims=True) - mean * mean   # one-pass
    y = (out - mean) * lax.rsqrt(var + 1e-5)
    o_ref[0] = y * g_ref[...] + beta_ref[...]


# ---------------------------------------------------------------------------
# Wrapper
# ---------------------------------------------------------------------------
def multi_head_attention(x, params, num_head, compute_dtype=COMPUTE_DTYPE):
    B, S, E = x.shape
    assert E % num_head == 0, "head num error"
    dh = E // num_head
    # The torch .view head split maps head h to the contiguous row block
    # [h*S/H, (h+1)*S/H) of each batch slab; that requires S % H == 0.
    assert S % num_head == 0, "fused kernel assumes seq_len % num_head == 0"

    wq, bq, wk, bk, wv, bv, wo, bo, gamma, beta = params
    inv = 1.0 / math.sqrt(dh)

    # One-time weight prep (outside the kernel, free):
    #   - fuse Q|K|V into one (E, 3E) weight, fold 1/sqrt(dh) into the Q part
    #   - pre-transpose so kernels compute y = x @ W^T + b
    wqkv = jnp.concatenate([wq.T * inv, wk.T, wv.T], axis=1)        # (E, 3E)
    bqkv = jnp.concatenate([bq * inv, bk, bv]).reshape(1, 3 * E)    # (1, 3E)
    woT = wo.T
    bo2 = bo.reshape(1, E)
    g2 = gamma.reshape(1, E)
    beta2 = beta.reshape(1, E)

    x_spec = pl.BlockSpec((1, S, E), lambda b: (b, 0, 0))
    wqkv_spec = pl.BlockSpec((E, 3 * E), lambda b: (0, 0))
    bqkv_spec = pl.BlockSpec((1, 3 * E), lambda b: (0, 0))
    wo_spec = pl.BlockSpec((E, E), lambda b: (0, 0))
    vec_spec = pl.BlockSpec((1, E), lambda b: (0, 0))

    kernel = functools.partial(fused_mha_kernel, compute_dtype=compute_dtype)
    return pl.pallas_call(
        kernel,
        grid=(B,),
        in_specs=[x_spec, wqkv_spec, bqkv_spec, wo_spec, vec_spec, vec_spec,
                  vec_spec],
        out_specs=x_spec,
        out_shape=jax.ShapeDtypeStruct((B, S, E), jnp.float32),
        scratch_shapes=[
            pltpu.VMEM((S, 3 * E), jnp.float32),   # fused Q|K|V projection
            pltpu.VMEM((S, dh), jnp.float32),      # grouped Q (per head)
            pltpu.VMEM((S, dh), jnp.float32),      # grouped K
            pltpu.VMEM((S, dh), jnp.float32),      # grouped V
            pltpu.VMEM((S, dh), jnp.float32),      # grouped context
            pltpu.VMEM((S, E), jnp.float32),       # assembled context
        ],
        compiler_params=pltpu.CompilerParams(
            dimension_semantics=("parallel",)),    # megacore split on v7x
    )(x, wqkv, bqkv, woT, bo2, g2, beta2)


# ---------------------------------------------------------------------------
# Pure-JAX reference (mirrors the PyTorch forward exactly)
# ---------------------------------------------------------------------------
def reference(x, params, num_head):
    wq, bq, wk, bk, wv, bv, wo, bo, gamma, beta = params
    B, S, E = x.shape
    dh = E // num_head
    Q = x @ wq.T + bq
    K = x @ wk.T + bk
    V = x @ wv.T + bv
    Q = Q.reshape(B * num_head, -1, dh)
    K = K.reshape(B * num_head, -1, dh)
    V = V.reshape(B * num_head, -1, dh)
    s = (Q @ jnp.swapaxes(K, -2, -1)) / math.sqrt(dh)
    p = jax.nn.softmax(s, axis=-1)
    ctx = (p @ V).reshape(B, -1, dh * num_head)
    out = ctx @ wo.T + bo
    out = out + x
    mean = out.mean(-1, keepdims=True)
    var = ((out - mean) ** 2).mean(-1, keepdims=True)
    return (out - mean) / jnp.sqrt(var + 1e-5) * gamma + beta


# ---------------------------------------------------------------------------
# Main
# ---------------------------------------------------------------------------
if __name__ == "__main__":
    B, S, E, H = 2, 8, 32, 4  # batch, seq, embed_dim, num_head
    key = jax.random.PRNGKey(0)
    kx, kq, kbq, kk, kbk, kv, kbv, ko, kbo = jax.random.split(key, 9)

    x = jax.random.normal(kx, (B, S, E), dtype=jnp.float32)

    def init_w(k):
        return 0.1 * jax.random.normal(k, (E, E), dtype=jnp.float32)

    def init_b(k):
        return 0.1 * jax.random.normal(k, (E,), dtype=jnp.float32)

    params = (
        init_w(kq), init_b(kbq),          # fc_q
        init_w(kk), init_b(kbk),          # fc_k
        init_w(kv), init_b(kbv),          # fc_v
        init_w(ko), init_b(kbo),          # fc (output projection)
        jnp.ones((E,), jnp.float32),      # layer_norm.weight
        jnp.zeros((E,), jnp.float32),     # layer_norm.bias
    )

    out = multi_head_attention(x, params, H)
    out = jax.block_until_ready(out)

    ref = reference(x, params, H)
    assert out.shape == (B, S, E)
    # 2e-3 tolerance: approximate (EUP) softmax reciprocal + score-scale folding
    # introduce ~1e-4-level deviations vs the exact-division f32 reference.
    assert jnp.allclose(out, ref, atol=2e-3, rtol=2e-3), "mismatch vs reference"

    print("KERNEL_OK")
</pallas_src>

<mosaic_0001>
module attributes {stable_mosaic.version = 11 : i64} {
  func.func @fused_mha_kernel(%arg0: i32, %arg1: memref<1x8x32xf32, #tpu.memory_space<vmem>>, %arg2: memref<32x96xf32, #tpu.memory_space<vmem>>, %arg3: memref<1x96xf32, #tpu.memory_space<vmem>>, %arg4: memref<32x32xf32, #tpu.memory_space<vmem>>, %arg5: memref<1x32xf32, #tpu.memory_space<vmem>>, %arg6: memref<1x32xf32, #tpu.memory_space<vmem>>, %arg7: memref<1x32xf32, #tpu.memory_space<vmem>>, %arg8: memref<1x8x32xf32, #tpu.memory_space<vmem>>, %arg9: memref<8x96xf32, #tpu.memory_space<vmem>>, %arg10: memref<8x8xf32, #tpu.memory_space<vmem>>, %arg11: memref<8x8xf32, #tpu.memory_space<vmem>>, %arg12: memref<8x8xf32, #tpu.memory_space<vmem>>, %arg13: memref<8x8xf32, #tpu.memory_space<vmem>>, %arg14: memref<8x32xf32, #tpu.memory_space<vmem>>) attributes {dimension_semantics = [#tpu.dimension_semantics<parallel>], iteration_bounds = array<i64: 2>, scalar_prefetch = 0 : i64, scratch_operands = 6 : i64, tpu.core_type = #tpu.core_type<tc>, window_params = [{transform_indices = @transform_0, window_bounds = array<i64: 1, 8, 32>}, {pipeline_mode = #tpu.pipeline_mode<synchronous>, transform_indices = @transform_1, window_bounds = array<i64: 32, 96>}, {pipeline_mode = #tpu.pipeline_mode<synchronous>, transform_indices = @transform_2, window_bounds = array<i64: 1, 96>}, {pipeline_mode = #tpu.pipeline_mode<synchronous>, transform_indices = @transform_3, window_bounds = array<i64: 32, 32>}, {pipeline_mode = #tpu.pipeline_mode<synchronous>, transform_indices = @transform_4, window_bounds = array<i64: 1, 32>}, {pipeline_mode = #tpu.pipeline_mode<synchronous>, transform_indices = @transform_5, window_bounds = array<i64: 1, 32>}, {pipeline_mode = #tpu.pipeline_mode<synchronous>, transform_indices = @transform_6, window_bounds = array<i64: 1, 32>}, {transform_indices = @transform_7, window_bounds = array<i64: 1, 8, 32>}]} {
    %c0 = arith.constant 0 : index
    %c0_0 = arith.constant 0 : index
    %c0_1 = arith.constant 0 : index
    %0 = vector.load %arg1[%c0, %c0_0, %c0_1] : memref<1x8x32xf32, #tpu.memory_space<vmem>>, vector<1x8x32xf32>
    %1 = vector.shape_cast %0 : vector<1x8x32xf32> to vector<8x32xf32>
    %c0_2 = arith.constant 0 : index
    %c0_3 = arith.constant 0 : index
    %2 = vector.load %arg2[%c0_2, %c0_3] : memref<32x96xf32, #tpu.memory_space<vmem>>, vector<32x96xf32>
    %cst = arith.constant dense<0.000000e+00> : vector<8x96xf32>
    %3 = tpu.matmul %1, %2, %cst {dimension_numbers = #tpu.dot_dimension_numbers<[1], [0], [0], [1], [0, 0, 1, 1], [], []>} : vector<8x32xf32>, vector<32x96xf32>, vector<8x96xf32> -> vector<8x96xf32>
    %c0_4 = arith.constant 0 : index
    %c0_5 = arith.constant 0 : index
    %4 = vector.load %arg3[%c0_4, %c0_5] : memref<1x96xf32, #tpu.memory_space<vmem>>, vector<1x96xf32>
    %5 = vector.broadcast %4 : vector<1x96xf32> to vector<8x96xf32>
    %6 = arith.addf %3, %5 : vector<8x96xf32>
    %c0_6 = arith.constant 0 : index
    %c0_7 = arith.constant 0 : index
    %7 = vector.load %arg9[%c0_6, %c0_7] : memref<8x96xf32, #tpu.memory_space<vmem>>, vector<8x96xf32>
    tpu.vector_store %arg9[%c0_6, %c0_7], %6 {strides = array<i32>} : memref<8x96xf32, #tpu.memory_space<vmem>>, vector<8x96xf32>,
    %c0_8 = arith.constant 0 : index
    %c0_9 = arith.constant 0 : index
    %8 = vector.load %arg9[%c0_8, %c0_9] : memref<8x96xf32, #tpu.memory_space<vmem>>, vector<2x8xf32>
    %c0_10 = arith.constant 0 : index
    %c0_11 = arith.constant 0 : index
    %9 = vector.load %arg10[%c0_10, %c0_11] : memref<8x8xf32, #tpu.memory_space<vmem>>, vector<2x8xf32>
    tpu.vector_store %arg10[%c0_10, %c0_11], %8 {strides = array<i32>} : memref<8x8xf32, #tpu.memory_space<vmem>>, vector<2x8xf32>,
    %c0_12 = arith.constant 0 : index
    %c32 = arith.constant 32 : index
    %10 = vector.load %arg9[%c0_12, %c32] : memref<8x96xf32, #tpu.memory_space<vmem>>, vector<2x8xf32>
    %c0_13 = arith.constant 0 : index
    %c0_14 = arith.constant 0 : index
    %11 = vector.load %arg11[%c0_13, %c0_14] : memref<8x8xf32, #tpu.memory_space<vmem>>, vector<2x8xf32>
    tpu.vector_store %arg11[%c0_13, %c0_14], %10 {strides = array<i32>} : memref<8x8xf32, #tpu.memory_space<vmem>>, vector<2x8xf32>,
    %c0_15 = arith.constant 0 : index
    %c64 = arith.constant 64 : index
    %12 = vector.load %arg9[%c0_15, %c64] : memref<8x96xf32, #tpu.memory_space<vmem>>, vector<2x8xf32>
    %c0_16 = arith.constant 0 : index
    %c0_17 = arith.constant 0 : index
    %13 = vector.load %arg12[%c0_16, %c0_17] : memref<8x8xf32, #tpu.memory_space<vmem>>, vector<2x8xf32>
    tpu.vector_store %arg12[%c0_16, %c0_17], %12 {strides = array<i32>} : memref<8x8xf32, #tpu.memory_space<vmem>>, vector<2x8xf32>,
    %c0_18 = arith.constant 0 : index
    %c8 = arith.constant 8 : index
    %14 = vector.load %arg9[%c0_18, %c8] : memref<8x96xf32, #tpu.memory_space<vmem>>, vector<2x8xf32>
    %c2 = arith.constant 2 : index
    %c0_19 = arith.constant 0 : index
    %15 = vector.load %arg10[%c2, %c0_19] : memref<8x8xf32, #tpu.memory_space<vmem>>, vector<2x8xf32>
    tpu.vector_store %arg10[%c2, %c0_19], %14 {strides = array<i32>} : memref<8x8xf32, #tpu.memory_space<vmem>>, vector<2x8xf32>,
    %c0_20 = arith.constant 0 : index
    %c40 = arith.constant 40 : index
    %16 = vector.load %arg9[%c0_20, %c40] : memref<8x96xf32, #tpu.memory_space<vmem>>, vector<2x8xf32>
    %c2_21 = arith.constant 2 : index
    %c0_22 = arith.constant 0 : index
    %17 = vector.load %arg11[%c2_21, %c0_22] : memref<8x8xf32, #tpu.memory_space<vmem>>, vector<2x8xf32>
    tpu.vector_store %arg11[%c2_21, %c0_22], %16 {strides = array<i32>} : memref<8x8xf32, #tpu.memory_space<vmem>>, vector<2x8xf32>,
    %c0_23 = arith.constant 0 : index
    %c72 = arith.constant 72 : index
    %18 = vector.load %arg9[%c0_23, %c72] : memref<8x96xf32, #tpu.memory_space<vmem>>, vector<2x8xf32>
    %c2_24 = arith.constant 2 : index
    %c0_25 = arith.constant 0 : index
    %19 = vector.load %arg12[%c2_24, %c0_25] : memref<8x8xf32, #tpu.memory_space<vmem>>, vector<2x8xf32>
    tpu.vector_store %arg12[%c2_24, %c0_25], %18 {strides = array<i32>} : memref<8x8xf32, #tpu.memory_space<vmem>>, vector<2x8xf32>,
    %c0_26 = arith.constant 0 : index
    %c16 = arith.constant 16 : index
    %20 = vector.load %arg9[%c0_26, %c16] : memref<8x96xf32, #tpu.memory_space<vmem>>, vector<2x8xf32>
    %c4 = arith.constant 4 : index
    %c0_27 = arith.constant 0 : index
    %21 = vector.load %arg10[%c4, %c0_27] : memref<8x8xf32, #tpu.memory_space<vmem>>, vector<2x8xf32>
    tpu.vector_store %arg10[%c4, %c0_27], %20 {strides = array<i32>} : memref<8x8xf32, #tpu.memory_space<vmem>>, vector<2x8xf32>,
    %c0_28 = arith.constant 0 : index
    %c48 = arith.constant 48 : index
    %22 = vector.load %arg9[%c0_28, %c48] : memref<8x96xf32, #tpu.memory_space<vmem>>, vector<2x8xf32>
    %c4_29 = arith.constant 4 : index
    %c0_30 = arith.constant 0 : index
    %23 = vector.load %arg11[%c4_29, %c0_30] : memref<8x8xf32, #tpu.memory_space<vmem>>, vector<2x8xf32>
    tpu.vector_store %arg11[%c4_29, %c0_30], %22 {strides = array<i32>} : memref<8x8xf32, #tpu.memory_space<vmem>>, vector<2x8xf32>,
    %c0_31 = arith.constant 0 : index
    %c80 = arith.constant 80 : index
    %24 = vector.load %arg9[%c0_31, %c80] : memref<8x96xf32, #tpu.memory_space<vmem>>, vector<2x8xf32>
    %c4_32 = arith.constant 4 : index
    %c0_33 = arith.constant 0 : index
    %25 = vector.load %arg12[%c4_32, %c0_33] : memref<8x8xf32, #tpu.memory_space<vmem>>, vector<2x8xf32>
    tpu.vector_store %arg12[%c4_32, %c0_33], %24 {strides = array<i32>} : memref<8x8xf32, #tpu.memory_space<vmem>>, vector<2x8xf32>,
    %c0_34 = arith.constant 0 : index
    %c24 = arith.constant 24 : index
    %26 = vector.load %arg9[%c0_34, %c24] : memref<8x96xf32, #tpu.memory_space<vmem>>, vector<2x8xf32>
    %c6 = arith.constant 6 : index
    %c0_35 = arith.constant 0 : index
    %27 = vector.load %arg10[%c6, %c0_35] : memref<8x8xf32, #tpu.memory_space<vmem>>, vector<2x8xf32>
    tpu.vector_store %arg10[%c6, %c0_35], %26 {strides = array<i32>} : memref<8x8xf32, #tpu.memory_space<vmem>>, vector<2x8xf32>,
    %c0_36 = arith.constant 0 : index
    %c56 = arith.constant 56 : index
    %28 = vector.load %arg9[%c0_36, %c56] : memref<8x96xf32, #tpu.memory_space<vmem>>, vector<2x8xf32>
    %c6_37 = arith.constant 6 : index
    %c0_38 = arith.constant 0 : index
    %29 = vector.load %arg11[%c6_37, %c0_38] : memref<8x8xf32, #tpu.memory_space<vmem>>, vector<2x8xf32>
    tpu.vector_store %arg11[%c6_37, %c0_38], %28 {strides = array<i32>} : memref<8x8xf32, #tpu.memory_space<vmem>>, vector<2x8xf32>,
    %c0_39 = arith.constant 0 : index
    %c88 = arith.constant 88 : index
    %30 = vector.load %arg9[%c0_39, %c88] : memref<8x96xf32, #tpu.memory_space<vmem>>, vector<2x8xf32>
    %c6_40 = arith.constant 6 : index
    %c0_41 = arith.constant 0 : index
    %31 = vector.load %arg12[%c6_40, %c0_41] : memref<8x8xf32, #tpu.memory_space<vmem>>, vector<2x8xf32>
    tpu.vector_store %arg12[%c6_40, %c0_41], %30 {strides = array<i32>} : memref<8x8xf32, #tpu.memory_space<vmem>>, vector<2x8xf32>,
    %c0_42 = arith.constant 0 : index
    %c0_43 = arith.constant 0 : index
    %32 = vector.load %arg10[%c0_42, %c0_43] : memref<8x8xf32, #tpu.memory_space<vmem>>, vector<8x8xf32>
    %c0_44 = arith.constant 0 : index
    %c0_45 = arith.constant 0 : index
    %33 = vector.load %arg11[%c0_44, %c0_45] : memref<8x8xf32, #tpu.memory_space<vmem>>, vector<8x8xf32>
    %c0_46 = arith.constant 0 : index
    %c0_47 = arith.constant 0 : index
    %34 = vector.load %arg12[%c0_46, %c0_47] : memref<8x8xf32, #tpu.memory_space<vmem>>, vector<8x8xf32>
    %cst_48 = arith.constant dense<0.000000e+00> : vector<8x8xf32>
    %35 = tpu.matmul %32, %33, %cst_48 {dimension_numbers = #tpu.dot_dimension_numbers<[1], [1], [0], [0], [0, 0, 1, 0], [], []>} : vector<8x8xf32>, vector<8x8xf32>, vector<8x8xf32> -> vector<8x8xf32>
    %cst_49 = arith.constant dense<0xFF800000> : vector<8xf32>
    %36 = vector.multi_reduction <maximumf>, %35, %cst_49 [1] : vector<8x8xf32> to vector<8xf32>
    %37 = vector.shape_cast %36 : vector<8xf32> to vector<8x1xf32>
    %38 = vector.broadcast %37 : vector<8x1xf32> to vector<8x8xf32>
    %39 = arith.subf %35, %38 : vector<8x8xf32>
    %40 = math.exp %39 : vector<8x8xf32>
    %cst_50 = arith.constant dense<0.000000e+00> : vector<8xf32>
    %41 = vector.multi_reduction <add>, %40, %cst_50 [1] : vector<8x8xf32> to vector<8xf32>
    %42 = vector.shape_cast %41 : vector<8xf32> to vector<8x1xf32>
    %43 = tpu.reciprocal %42 {approx = true} : vector<8x1xf32> -> vector<8x1xf32>
    %44 = vector.broadcast %43 : vector<8x1xf32> to vector<8x8xf32>
    %45 = arith.mulf %40, %44 : vector<8x8xf32>
    %cst_51 = arith.constant dense<0.000000e+00> : vector<8x8xf32>
    %46 = tpu.matmul %45, %34, %cst_51 {dimension_numbers = #tpu.dot_dimension_numbers<[1], [0], [0], [1], [0, 0, 1, 1], [], []>} : vector<8x8xf32>, vector<8x8xf32>, vector<8x8xf32> -> vector<8x8xf32>
    %c0_52 = arith.constant 0 : index
    %c0_53 = arith.constant 0 : index
    %47 = vector.load %arg13[%c0_52, %c0_53] : memref<8x8xf32, #tpu.memory_space<vmem>>, vector<8x8xf32>
    tpu.vector_store %arg13[%c0_52, %c0_53], %46 {strides = array<i32>} : memref<8x8xf32, #tpu.memory_space<vmem>>, vector<8x8xf32>,
    %c0_54 = arith.constant 0 : index
    %c0_55 = arith.constant 0 : index
    %48 = vector.load %arg13[%c0_54, %c0_55] : memref<8x8xf32, #tpu.memory_space<vmem>>, vector<2x8xf32>
    %c0_56 = arith.constant 0 : index
    %c0_57 = arith.constant 0 : index
    %49 = vector.load %arg14[%c0_56, %c0_57] : memref<8x32xf32, #tpu.memory_space<vmem>>, vector<2x8xf32>
    tpu.vector_store %arg14[%c0_56, %c0_57], %48 {strides = array<i32>} : memref<8x32xf32, #tpu.memory_space<vmem>>, vector<2x8xf32>,
    %c2_58 = arith.constant 2 : index
    %c0_59 = arith.constant 0 : index
    %50 = vector.load %arg13[%c2_58, %c0_59] : memref<8x8xf32, #tpu.memory_space<vmem>>, vector<2x8xf32>
    %c0_60 = arith.constant 0 : index
    %c8_61 = arith.constant 8 : index
    %51 = vector.load %arg14[%c0_60, %c8_61] : memref<8x32xf32, #tpu.memory_space<vmem>>, vector<2x8xf32>
    tpu.vector_store %arg14[%c0_60, %c8_61], %50 {strides = array<i32>} : memref<8x32xf32, #tpu.memory_space<vmem>>, vector<2x8xf32>,
    %c4_62 = arith.constant 4 : index
    %c0_63 = arith.constant 0 : index
    %52 = vector.load %arg13[%c4_62, %c0_63] : memref<8x8xf32, #tpu.memory_space<vmem>>, vector<2x8xf32>
    %c0_64 = arith.constant 0 : index
    %c16_65 = arith.constant 16 : index
    %53 = vector.load %arg14[%c0_64, %c16_65] : memref<8x32xf32, #tpu.memory_space<vmem>>, vector<2x8xf32>
    tpu.vector_store %arg14[%c0_64, %c16_65], %52 {strides = array<i32>} : memref<8x32xf32, #tpu.memory_space<vmem>>, vector<2x8xf32>,
    %c6_66 = arith.constant 6 : index
    %c0_67 = arith.constant 0 : index
    %54 = vector.load %arg13[%c6_66, %c0_67] : memref<8x8xf32, #tpu.memory_space<vmem>>, vector<2x8xf32>
    %c0_68 = arith.constant 0 : index
    %c24_69 = arith.constant 24 : index
    %55 = vector.load %arg14[%c0_68, %c24_69] : memref<8x32xf32, #tpu.memory_space<vmem>>, vector<2x8xf32>
    tpu.vector_store %arg14[%c0_68, %c24_69], %54 {strides = array<i32>} : memref<8x32xf32, #tpu.memory_space<vmem>>, vector<2x8xf32>,
    %c2_70 = arith.constant 2 : index
    %c0_71 = arith.constant 0 : index
    %56 = vector.load %arg9[%c2_70, %c0_71] : memref<8x96xf32, #tpu.memory_space<vmem>>, vector<2x8xf32>
    %c0_72 = arith.constant 0 : index
    %c0_73 = arith.constant 0 : index
    %57 = vector.load %arg10[%c0_72, %c0_73] : memref<8x8xf32, #tpu.memory_space<vmem>>, vector<2x8xf32>
    tpu.vector_store %arg10[%c0_72, %c0_73], %56 {strides = array<i32>} : memref<8x8xf32, #tpu.memory_space<vmem>>, vector<2x8xf32>,
    %c2_74 = arith.constant 2 : index
    %c32_75 = arith.constant 32 : index
    %58 = vector.load %arg9[%c2_74, %c32_75] : memref<8x96xf32, #tpu.memory_space<vmem>>, vector<2x8xf32>
    %c0_76 = arith.constant 0 : index
    %c0_77 = arith.constant 0 : index
    %59 = vector.load %arg11[%c0_76, %c0_77] : memref<8x8xf32, #tpu.memory_space<vmem>>, vector<2x8xf32>
    tpu.vector_store %arg11[%c0_76, %c0_77], %58 {strides = array<i32>} : memref<8x8xf32, #tpu.memory_space<vmem>>, vector<2x8xf32>,
    %c2_78 = arith.constant 2 : index
    %c64_79 = arith.constant 64 : index
    %60 = vector.load %arg9[%c2_78, %c64_79] : memref<8x96xf32, #tpu.memory_space<vmem>>, vector<2x8xf32>
    %c0_80 = arith.constant 0 : index
    %c0_81 = arith.constant 0 : index
    %61 = vector.load %arg12[%c0_80, %c0_81] : memref<8x8xf32, #tpu.memory_space<vmem>>, vector<2x8xf32>
    tpu.vector_store %arg12[%c0_80, %c0_81], %60 {strides = array<i32>} : memref<8x8xf32, #tpu.memory_space<vmem>>, vector<2x8xf32>,
    %c2_82 = arith.constant 2 : index
    %c8_83 = arith.constant 8 : index
    %62 = vector.load %arg9[%c2_82, %c8_83] : memref<8x96xf32, #tpu.memory_space<vmem>>, vector<2x8xf32>
    %c2_84 = arith.constant 2 : index
    %c0_85 = arith.constant 0 : index
    %63 = vector.load %arg10[%c2_84, %c0_85] : memref<8x8xf32, #tpu.memory_space<vmem>>, vector<2x8xf32>
    tpu.vector_store %arg10[%c2_84, %c0_85], %62 {strides = array<i32>} : memref<8x8xf32, #tpu.memory_space<vmem>>, vector<2x8xf32>,
    %c2_86 = arith.constant 2 : index
    %c40_87 = arith.constant 40 : index
    %64 = vector.load %arg9[%c2_86, %c40_87] : memref<8x96xf32, #tpu.memory_space<vmem>>, vector<2x8xf32>
    %c2_88 = arith.constant 2 : index
    %c0_89 = arith.constant 0 : index
    %65 = vector.load %arg11[%c2_88, %c0_89] : memref<8x8xf32, #tpu.memory_space<vmem>>, vector<2x8xf32>
    tpu.vector_store %arg11[%c2_88, %c0_89], %64 {strides = array<i32>} : memref<8x8xf32, #tpu.memory_space<vmem>>, vector<2x8xf32>,
    %c2_90 = arith.constant 2 : index
    %c72_91 = arith.constant 72 : index
    %66 = vector.load %arg9[%c2_90, %c72_91] : memref<8x96xf32, #tpu.memory_space<vmem>>, vector<2x8xf32>
    %c2_92 = arith.constant 2 : index
    %c0_93 = arith.constant 0 : index
    %67 = vector.load %arg12[%c2_92, %c0_93] : memref<8x8xf32, #tpu.memory_space<vmem>>, vector<2x8xf32>
    tpu.vector_store %arg12[%c2_92, %c0_93], %66 {strides = array<i32>} : memref<8x8xf32, #tpu.memory_space<vmem>>, vector<2x8xf32>,
    %c2_94 = arith.constant 2 : index
    %c16_95 = arith.constant 16 : index
    %68 = vector.load %arg9[%c2_94, %c16_95] : memref<8x96xf32, #tpu.memory_space<vmem>>, vector<2x8xf32>
    %c4_96 = arith.constant 4 : index
    %c0_97 = arith.constant 0 : index
    %69 = vector.load %arg10[%c4_96, %c0_97] : memref<8x8xf32, #tpu.memory_space<vmem>>, vector<2x8xf32>
    tpu.vector_store %arg10[%c4_96, %c0_97], %68 {strides = array<i32>} : memref<8x8xf32, #tpu.memory_space<vmem>>, vector<2x8xf32>,
    %c2_98 = arith.constant 2 : index
    %c48_99 = arith.constant 48 : index
    %70 = vector.load %arg9[%c2_98, %c48_99] : memref<8x96xf32, #tpu.memory_space<vmem>>, vector<2x8xf32>
    %c4_100 = arith.constant 4 : index
    %c0_101 = arith.constant 0 : index
    %71 = vector.load %arg11[%c4_100, %c0_101] : memref<8x8xf32, #tpu.memory_space<vmem>>, vector<2x8xf32>
    tpu.vector_store %arg11[%c4_100, %c0_101], %70 {strides = array<i32>} : memref<8x8xf32, #tpu.memory_space<vmem>>, vector<2x8xf32>,
    %c2_102 = arith.constant 2 : index
    %c80_103 = arith.constant 80 : index
    %72 = vector.load %arg9[%c2_102, %c80_103] : memref<8x96xf32, #tpu.memory_space<vmem>>, vector<2x8xf32>
    %c4_104 = arith.constant 4 : index
    %c0_105 = arith.constant 0 : index
    %73 = vector.load %arg12[%c4_104, %c0_105] : memref<8x8xf32, #tpu.memory_space<vmem>>, vector<2x8xf32>
    tpu.vector_store %arg12[%c4_104, %c0_105], %72 {strides = array<i32>} : memref<8x8xf32, #tpu.memory_space<vmem>>, vector<2x8xf32>,
    %c2_106 = arith.constant 2 : index
    %c24_107 = arith.constant 24 : index
    %74 = vector.load %arg9[%c2_106, %c24_107] : memref<8x96xf32, #tpu.memory_space<vmem>>, vector<2x8xf32>
    %c6_108 = arith.constant 6 : index
    %c0_109 = arith.constant 0 : index
    %75 = vector.load %arg10[%c6_108, %c0_109] : memref<8x8xf32, #tpu.memory_space<vmem>>, vector<2x8xf32>
    tpu.vector_store %arg10[%c6_108, %c0_109], %74 {strides = array<i32>} : memref<8x8xf32, #tpu.memory_space<vmem>>, vector<2x8xf32>,
    %c2_110 = arith.constant 2 : index
    %c56_111 = arith.constant 56 : index
    %76 = vector.load %arg9[%c2_110, %c56_111] : memref<8x96xf32, #tpu.memory_space<vmem>>, vector<2x8xf32>
    %c6_112 = arith.constant 6 : index
    %c0_113 = arith.constant 0 : index
    %77 = vector.load %arg11[%c6_112, %c0_113] : memref<8x8xf32, #tpu.memory_space<vmem>>, vector<2x8xf32>
    tpu.vector_store %arg11[%c6_112, %c0_113], %76 {strides = array<i32>} : memref<8x8xf32, #tpu.memory_space<vmem>>, vector<2x8xf32>,
    %c2_114 = arith.constant 2 : index
    %c88_115 = arith.constant 88 : index
    %78 = vector.load %arg9[%c2_114, %c88_115] : memref<8x96xf32, #tpu.memory_space<vmem>>, vector<2x8xf32>
    %c6_116 = arith.constant 6 : index
    %c0_117 = arith.constant 0 : index
    %79 = vector.load %arg12[%c6_116, %c0_117] : memref<8x8xf32, #tpu.memory_space<vmem>>, vector<2x8xf32>
    tpu.vector_store %arg12[%c6_116, %c0_117], %78 {strides = array<i32>} : memref<8x8xf32, #tpu.memory_space<vmem>>, vector<2x8xf32>,
    %c0_118 = arith.constant 0 : index
    %c0_119 = arith.constant 0 : index
    %80 = vector.load %arg10[%c0_118, %c0_119] : memref<8x8xf32, #tpu.memory_space<vmem>>, vector<8x8xf32>
    %c0_120 = arith.constant 0 : index
    %c0_121 = arith.constant 0 : index
    %81 = vector.load %arg11[%c0_120, %c0_121] : memref<8x8xf32, #tpu.memory_space<vmem>>, vector<8x8xf32>
    %c0_122 = arith.constant 0 : index
    %c0_123 = arith.constant 0 : index
    %82 = vector.load %arg12[%c0_122, %c0_123] : memref<8x8xf32, #tpu.memory_space<vmem>>, vector<8x8xf32>
    %cst_124 = arith.constant dense<0.000000e+00> : vector<8x8xf32>
    %83 = tpu.matmul %80, %81, %cst_124 {dimension_numbers = #tpu.dot_dimension_numbers<[1], [1], [0], [0], [0, 0, 1, 0], [], []>} : vector<8x8xf32>, vector<8x8xf32>, vector<8x8xf32> -> vector<8x8xf32>
    %cst_125 = arith.constant dense<0xFF800000> : vector<8xf32>
    %84 = vector.multi_reduction <maximumf>, %83, %cst_125 [1] : vector<8x8xf32> to vector<8xf32>
    %85 = vector.shape_cast %84 : vector<8xf32> to vector<8x1xf32>
    %86 = vector.broadcast %85 : vector<8x1xf32> to vector<8x8xf32>
    %87 = arith.subf %83, %86 : vector<8x8xf32>
    %88 = math.exp %87 : vector<8x8xf32>
    %cst_126 = arith.constant dense<0.000000e+00> : vector<8xf32>
    %89 = vector.multi_reduction <add>, %88, %cst_126 [1] : vector<8x8xf32> to vector<8xf32>
    %90 = vector.shape_cast %89 : vector<8xf32> to vector<8x1xf32>
    %91 = tpu.reciprocal %90 {approx = true} : vector<8x1xf32> -> vector<8x1xf32>
    %92 = vector.broadcast %91 : vector<8x1xf32> to vector<8x8xf32>
    %93 = arith.mulf %88, %92 : vector<8x8xf32>
    %cst_127 = arith.constant dense<0.000000e+00> : vector<8x8xf32>
    %94 = tpu.matmul %93, %82, %cst_127 {dimension_numbers = #tpu.dot_dimension_numbers<[1], [0], [0], [1], [0, 0, 1, 1], [], []>} : vector<8x8xf32>, vector<8x8xf32>, vector<8x8xf32> -> vector<8x8xf32>
    %c0_128 = arith.constant 0 : index
    %c0_129 = arith.constant 0 : index
    %95 = vector.load %arg13[%c0_128, %c0_129] : memref<8x8xf32, #tpu.memory_space<vmem>>, vector<8x8xf32>
    tpu.vector_store %arg13[%c0_128, %c0_129], %94 {strides = array<i32>} : memref<8x8xf32, #tpu.memory_space<vmem>>, vector<8x8xf32>,
    %c0_130 = arith.constant 0 : index
    %c0_131 = arith.constant 0 : index
    %96 = vector.load %arg13[%c0_130, %c0_131] : memref<8x8xf32, #tpu.memory_space<vmem>>, vector<2x8xf32>
    %c2_132 = arith.constant 2 : index
    %c0_133 = arith.constant 0 : index
    %97 = vector.load %arg14[%c2_132, %c0_133] : memref<8x32xf32, #tpu.memory_space<vmem>>, vector<2x8xf32>
    tpu.vector_store %arg14[%c2_132, %c0_133], %96 {strides = array<i32>} : memref<8x32xf32, #tpu.memory_space<vmem>>, vector<2x8xf32>,
    %c2_134 = arith.constant 2 : index
    %c0_135 = arith.constant 0 : index
    %98 = vector.load %arg13[%c2_134, %c0_135] : memref<8x8xf32, #tpu.memory_space<vmem>>, vector<2x8xf32>
    %c2_136 = arith.constant 2 : index
    %c8_137 = arith.constant 8 : index
    %99 = vector.load %arg14[%c2_136, %c8_137] : memref<8x32xf32, #tpu.memory_space<vmem>>, vector<2x8xf32>
    tpu.vector_store %arg14[%c2_136, %c8_137], %98 {strides = array<i32>} : memref<8x32xf32, #tpu.memory_space<vmem>>, vector<2x8xf32>,
    %c4_138 = arith.constant 4 : index
    %c0_139 = arith.constant 0 : index
    %100 = vector.load %arg13[%c4_138, %c0_139] : memref<8x8xf32, #tpu.memory_space<vmem>>, vector<2x8xf32>
    %c2_140 = arith.constant 2 : index
    %c16_141 = arith.constant 16 : index
    %101 = vector.load %arg14[%c2_140, %c16_141] : memref<8x32xf32, #tpu.memory_space<vmem>>, vector<2x8xf32>
    tpu.vector_store %arg14[%c2_140, %c16_141], %100 {strides = array<i32>} : memref<8x32xf32, #tpu.memory_space<vmem>>, vector<2x8xf32>,
    %c6_142 = arith.constant 6 : index
    %c0_143 = arith.constant 0 : index
    %102 = vector.load %arg13[%c6_142, %c0_143] : memref<8x8xf32, #tpu.memory_space<vmem>>, vector<2x8xf32>
    %c2_144 = arith.constant 2 : index
    %c24_145 = arith.constant 24 : index
    %103 = vector.load %arg14[%c2_144, %c24_145] : memref<8x32xf32, #tpu.memory_space<vmem>>, vector<2x8xf32>
    tpu.vector_store %arg14[%c2_144, %c24_145], %102 {strides = array<i32>} : memref<8x32xf32, #tpu.memory_space<vmem>>, vector<2x8xf32>,
    %c4_146 = arith.constant 4 : index
    %c0_147 = arith.constant 0 : index
    %104 = vector.load %arg9[%c4_146, %c0_147] : memref<8x96xf32, #tpu.memory_space<vmem>>, vector<2x8xf32>
    %c0_148 = arith.constant 0 : index
    %c0_149 = arith.constant 0 : index
    %105 = vector.load %arg10[%c0_148, %c0_149] : memref<8x8xf32, #tpu.memory_space<vmem>>, vector<2x8xf32>
    tpu.vector_store %arg10[%c0_148, %c0_149], %104 {strides = array<i32>} : memref<8x8xf32, #tpu.memory_space<vmem>>, vector<2x8xf32>,
    %c4_150 = arith.constant 4 : index
    %c32_151 = arith.constant 32 : index
    %106 = vector.load %arg9[%c4_150, %c32_151] : memref<8x96xf32, #tpu.memory_space<vmem>>, vector<2x8xf32>
    %c0_152 = arith.constant 0 : index
    %c0_153 = arith.constant 0 : index
    %107 = vector.load %arg11[%c0_152, %c0_153] : memref<8x8xf32, #tpu.memory_space<vmem>>, vector<2x8xf32>
    tpu.vector_store %arg11[%c0_152, %c0_153], %106 {strides = array<i32>} : memref<8x8xf32, #tpu.memory_space<vmem>>, vector<2x8xf32>,
    %c4_154 = arith.constant 4 : index
    %c64_155 = arith.constant 64 : index
    %108 = vector.load %arg9[%c4_154, %c64_155] : memref<8x96xf32, #tpu.memory_space<vmem>>, vector<2x8xf32>
    %c0_156 = arith.constant 0 : index
    %c0_157 = arith.constant 0 : index
    %109 = vector.load %arg12[%c0_156, %c0_157] : memref<8x8xf32, #tpu.memory_space<vmem>>, vector<2x8xf32>
    tpu.vector_store %arg12[%c0_156, %c0_157], %108 {strides = array<i32>} : memref<8x8xf32, #tpu.memory_space<vmem>>, vector<2x8xf32>,
    %c4_158 = arith.constant 4 : index
    %c8_159 = arith.constant 8 : index
    %110 = vector.load %arg9[%c4_158, %c8_159] : memref<8x96xf32, #tpu.memory_space<vmem>>, vector<2x8xf32>
    %c2_160 = arith.constant 2 : index
    %c0_161 = arith.constant 0 : index
    %111 = vector.load %arg10[%c2_160, %c0_161] : memref<8x8xf32, #tpu.memory_space<vmem>>, vector<2x8xf32>
    tpu.vector_store %arg10[%c2_160, %c0_161], %110 {strides = array<i32>} : memref<8x8xf32, #tpu.memory_space<vmem>>, vector<2x8xf32>,
    %c4_162 = arith.constant 4 : index
    %c40_163 = arith.constant 40 : index
    %112 = vector.load %arg9[%c4_162, %c40_163] : memref<8x96xf32, #tpu.memory_space<vmem>>, vector<2x8xf32>
    %c2_164 = arith.constant 2 : index
    %c0_165 = arith.constant 0 : index
    %113 = vector.load %arg11[%c2_164, %c0_165] : memref<8x8xf32, #tpu.memory_space<vmem>>, vector<2x8xf32>
    tpu.vector_store %arg11[%c2_164, %c0_165], %112 {strides = array<i32>} : memref<8x8xf32, #tpu.memory_space<vmem>>, vector<2x8xf32>,
    %c4_166 = arith.constant 4 : index
    %c72_167 = arith.constant 72 : index
    %114 = vector.load %arg9[%c4_166, %c72_167] : memref<8x96xf32, #tpu.memory_space<vmem>>, vector<2x8xf32>
    %c2_168 = arith.constant 2 : index
    %c0_169 = arith.constant 0 : index
    %115 = vector.load %arg12[%c2_168, %c0_169] : memref<8x8xf32, #tpu.memory_space<vmem>>, vector<2x8xf32>
    tpu.vector_store %arg12[%c2_168, %c0_169], %114 {strides = array<i32>} : memref<8x8xf32, #tpu.memory_space<vmem>>, vector<2x8xf32>,
    %c4_170 = arith.constant 4 : index
    %c16_171 = arith.constant 16 : index
    %116 = vector.load %arg9[%c4_170, %c16_171] : memref<8x96xf32, #tpu.memory_space<vmem>>, vector<2x8xf32>
    %c4_172 = arith.constant 4 : index
    %c0_173 = arith.constant 0 : index
    %117 = vector.load %arg10[%c4_172, %c0_173] : memref<8x8xf32, #tpu.memory_space<vmem>>, vector<2x8xf32>
    tpu.vector_store %arg10[%c4_172, %c0_173], %116 {strides = array<i32>} : memref<8x8xf32, #tpu.memory_space<vmem>>, vector<2x8xf32>,
    %c4_174 = arith.constant 4 : index
    %c48_175 = arith.constant 48 : index
    %118 = vector.load %arg9[%c4_174, %c48_175] : memref<8x96xf32, #tpu.memory_space<vmem>>, vector<2x8xf32>
    %c4_176 = arith.constant 4 : index
    %c0_177 = arith.constant 0 : index
    %119 = vector.load %arg11[%c4_176, %c0_177] : memref<8x8xf32, #tpu.memory_space<vmem>>, vector<2x8xf32>
    tpu.vector_store %arg11[%c4_176, %c0_177], %118 {strides = array<i32>} : memref<8x8xf32, #tpu.memory_space<vmem>>, vector<2x8xf32>,
    %c4_178 = arith.constant 4 : index
    %c80_179 = arith.constant 80 : index
    %120 = vector.load %arg9[%c4_178, %c80_179] : memref<8x96xf32, #tpu.memory_space<vmem>>, vector<2x8xf32>
    %c4_180 = arith.constant 4 : index
    %c0_181 = arith.constant 0 : index
    %121 = vector.load %arg12[%c4_180, %c0_181] : memref<8x8xf32, #tpu.memory_space<vmem>>, vector<2x8xf32>
    tpu.vector_store %arg12[%c4_180, %c0_181], %120 {strides = array<i32>} : memref<8x8xf32, #tpu.memory_space<vmem>>, vector<2x8xf32>,
    %c4_182 = arith.constant 4 : index
    %c24_183 = arith.constant 24 : index
    %122 = vector.load %arg9[%c4_182, %c24_183] : memref<8x96xf32, #tpu.memory_space<vmem>>, vector<2x8xf32>
    %c6_184 = arith.constant 6 : index
    %c0_185 = arith.constant 0 : index
    %123 = vector.load %arg10[%c6_184, %c0_185] : memref<8x8xf32, #tpu.memory_space<vmem>>, vector<2x8xf32>
    tpu.vector_store %arg10[%c6_184, %c0_185], %122 {strides = array<i32>} : memref<8x8xf32, #tpu.memory_space<vmem>>, vector<2x8xf32>,
    %c4_186 = arith.constant 4 : index
    %c56_187 = arith.constant 56 : index
    %124 = vector.load %arg9[%c4_186, %c56_187] : memref<8x96xf32, #tpu.memory_space<vmem>>, vector<2x8xf32>
    %c6_188 = arith.constant 6 : index
    %c0_189 = arith.constant 0 : index
    %125 = vector.load %arg11[%c6_188, %c0_189] : memref<8x8xf32, #tpu.memory_space<vmem>>, vector<2x8xf32>
    tpu.vector_store %arg11[%c6_188, %c0_189], %124 {strides = array<i32>} : memref<8x8xf32, #tpu.memory_space<vmem>>, vector<2x8xf32>,
    %c4_190 = arith.constant 4 : index
    %c88_191 = arith.constant 88 : index
    %126 = vector.load %arg9[%c4_190, %c88_191] : memref<8x96xf32, #tpu.memory_space<vmem>>, vector<2x8xf32>
    %c6_192 = arith.constant 6 : index
    %c0_193 = arith.constant 0 : index
    %127 = vector.load %arg12[%c6_192, %c0_193] : memref<8x8xf32, #tpu.memory_space<vmem>>, vector<2x8xf32>
    tpu.vector_store %arg12[%c6_192, %c0_193], %126 {strides = array<i32>} : memref<8x8xf32, #tpu.memory_space<vmem>>, vector<2x8xf32>,
    %c0_194 = arith.constant 0 : index
    %c0_195 = arith.constant 0 : index
    %128 = vector.load %arg10[%c0_194, %c0_195] : memref<8x8xf32, #tpu.memory_space<vmem>>, vector<8x8xf32>
    %c0_196 = arith.constant 0 : index
    %c0_197 = arith.constant 0 : index
    %129 = vector.load %arg11[%c0_196, %c0_197] : memref<8x8xf32, #tpu.memory_space<vmem>>, vector<8x8xf32>
    %c0_198 = arith.constant 0 : index
    %c0_199 = arith.constant 0 : index
    %130 = vector.load %arg12[%c0_198, %c0_199] : memref<8x8xf32, #tpu.memory_space<vmem>>, vector<8x8xf32>
    %cst_200 = arith.constant dense<0.000000e+00> : vector<8x8xf32>
    %131 = tpu.matmul %128, %129, %cst_200 {dimension_numbers = #tpu.dot_dimension_numbers<[1], [1], [0], [0], [0, 0, 1, 0], [], []>} : vector<8x8xf32>, vector<8x8xf32>, vector<8x8xf32> -> vector<8x8xf32>
    %cst_201 = arith.constant dense<0xFF800000> : vector<8xf32>
    %132 = vector.multi_reduction <maximumf>, %131, %cst_201 [1] : vector<8x8xf32> to vector<8xf32>
    %133 = vector.shape_cast %132 : vector<8xf32> to vector<8x1xf32>
    %134 = vector.broadcast %133 : vector<8x1xf32> to vector<8x8xf32>
    %135 = arith.subf %131, %134 : vector<8x8xf32>
    %136 = math.exp %135 : vector<8x8xf32>
    %cst_202 = arith.constant dense<0.000000e+00> : vector<8xf32>
    %137 = vector.multi_reduction <add>, %136, %cst_202 [1] : vector<8x8xf32> to vector<8xf32>
    %138 = vector.shape_cast %137 : vector<8xf32> to vector<8x1xf32>
    %139 = tpu.reciprocal %138 {approx = true} : vector<8x1xf32> -> vector<8x1xf32>
    %140 = vector.broadcast %139 : vector<8x1xf32> to vector<8x8xf32>
    %141 = arith.mulf %136, %140 : vector<8x8xf32>
    %cst_203 = arith.constant dense<0.000000e+00> : vector<8x8xf32>
    %142 = tpu.matmul %141, %130, %cst_203 {dimension_numbers = #tpu.dot_dimension_numbers<[1], [0], [0], [1], [0, 0, 1, 1], [], []>} : vector<8x8xf32>, vector<8x8xf32>, vector<8x8xf32> -> vector<8x8xf32>
    %c0_204 = arith.constant 0 : index
    %c0_205 = arith.constant 0 : index
    %143 = vector.load %arg13[%c0_204, %c0_205] : memref<8x8xf32, #tpu.memory_space<vmem>>, vector<8x8xf32>
    tpu.vector_store %arg13[%c0_204, %c0_205], %142 {strides = array<i32>} : memref<8x8xf32, #tpu.memory_space<vmem>>, vector<8x8xf32>,
    %c0_206 = arith.constant 0 : index
    %c0_207 = arith.constant 0 : index
    %144 = vector.load %arg13[%c0_206, %c0_207] : memref<8x8xf32, #tpu.memory_space<vmem>>, vector<2x8xf32>
    %c4_208 = arith.constant 4 : index
    %c0_209 = arith.constant 0 : index
    %145 = vector.load %arg14[%c4_208, %c0_209] : memref<8x32xf32, #tpu.memory_space<vmem>>, vector<2x8xf32>
    tpu.vector_store %arg14[%c4_208, %c0_209], %144 {strides = array<i32>} : memref<8x32xf32, #tpu.memory_space<vmem>>, vector<2x8xf32>,
    %c2_210 = arith.constant 2 : index
    %c0_211 = arith.constant 0 : index
    %146 = vector.load %arg13[%c2_210, %c0_211] : memref<8x8xf32, #tpu.memory_space<vmem>>, vector<2x8xf32>
    %c4_212 = arith.constant 4 : index
    %c8_213 = arith.constant 8 : index
    %147 = vector.load %arg14[%c4_212, %c8_213] : memref<8x32xf32, #tpu.memory_space<vmem>>, vector<2x8xf32>
    tpu.vector_store %arg14[%c4_212, %c8_213], %146 {strides = array<i32>} : memref<8x32xf32, #tpu.memory_space<vmem>>, vector<2x8xf32>,
    %c4_214 = arith.constant 4 : index
    %c0_215 = arith.constant 0 : index
    %148 = vector.load %arg13[%c4_214, %c0_215] : memref<8x8xf32, #tpu.memory_space<vmem>>, vector<2x8xf32>
    %c4_216 = arith.constant 4 : index
    %c16_217 = arith.constant 16 : index
    %149 = vector.load %arg14[%c4_216, %c16_217] : memref<8x32xf32, #tpu.memory_space<vmem>>, vector<2x8xf32>
    tpu.vector_store %arg14[%c4_216, %c16_217], %148 {strides = array<i32>} : memref<8x32xf32, #tpu.memory_space<vmem>>, vector<2x8xf32>,
    %c6_218 = arith.constant 6 : index
    %c0_219 = arith.constant 0 : index
    %150 = vector.load %arg13[%c6_218, %c0_219] : memref<8x8xf32, #tpu.memory_space<vmem>>, vector<2x8xf32>
    %c4_220 = arith.constant 4 : index
    %c24_221 = arith.constant 24 : index
    %151 = vector.load %arg14[%c4_220, %c24_221] : memref<8x32xf32, #tpu.memory_space<vmem>>, vector<2x8xf32>
    tpu.vector_store %arg14[%c4_220, %c24_221], %150 {strides = array<i32>} : memref<8x32xf32, #tpu.memory_space<vmem>>, vector<2x8xf32>,
    %c6_222 = arith.constant 6 : index
    %c0_223 = arith.constant 0 : index
    %152 = vector.load %arg9[%c6_222, %c0_223] : memref<8x96xf32, #tpu.memory_space<vmem>>, vector<2x8xf32>
    %c0_224 = arith.constant 0 : index
    %c0_225 = arith.constant 0 : index
    %153 = vector.load %arg10[%c0_224, %c0_225] : memref<8x8xf32, #tpu.memory_space<vmem>>, vector<2x8xf32>
    tpu.vector_store %arg10[%c0_224, %c0_225], %152 {strides = array<i32>} : memref<8x8xf32, #tpu.memory_space<vmem>>, vector<2x8xf32>,
    %c6_226 = arith.constant 6 : index
    %c32_227 = arith.constant 32 : index
    %154 = vector.load %arg9[%c6_226, %c32_227] : memref<8x96xf32, #tpu.memory_space<vmem>>, vector<2x8xf32>
    %c0_228 = arith.constant 0 : index
    %c0_229 = arith.constant 0 : index
    %155 = vector.load %arg11[%c0_228, %c0_229] : memref<8x8xf32, #tpu.memory_space<vmem>>, vector<2x8xf32>
    tpu.vector_store %arg11[%c0_228, %c0_229], %154 {strides = array<i32>} : memref<8x8xf32, #tpu.memory_space<vmem>>, vector<2x8xf32>,
    %c6_230 = arith.constant 6 : index
    %c64_231 = arith.constant 64 : index
    %156 = vector.load %arg9[%c6_230, %c64_231] : memref<8x96xf32, #tpu.memory_space<vmem>>, vector<2x8xf32>
    %c0_232 = arith.constant 0 : index
    %c0_233 = arith.constant 0 : index
    %157 = vector.load %arg12[%c0_232, %c0_233] : memref<8x8xf32, #tpu.memory_space<vmem>>, vector<2x8xf32>
    tpu.vector_store %arg12[%c0_232, %c0_233], %156 {strides = array<i32>} : memref<8x8xf32, #tpu.memory_space<vmem>>, vector<2x8xf32>,
    %c6_234 = arith.constant 6 : index
    %c8_235 = arith.constant 8 : index
    %158 = vector.load %arg9[%c6_234, %c8_235] : memref<8x96xf32, #tpu.memory_space<vmem>>, vector<2x8xf32>
    %c2_236 = arith.constant 2 : index
    %c0_237 = arith.constant 0 : index
    %159 = vector.load %arg10[%c2_236, %c0_237] : memref<8x8xf32, #tpu.memory_space<vmem>>, vector<2x8xf32>
    tpu.vector_store %arg10[%c2_236, %c0_237], %158 {strides = array<i32>} : memref<8x8xf32, #tpu.memory_space<vmem>>, vector<2x8xf32>,
    %c6_238 = arith.constant 6 : index
    %c40_239 = arith.constant 40 : index
    %160 = vector.load %arg9[%c6_238, %c40_239] : memref<8x96xf32, #tpu.memory_space<vmem>>, vector<2x8xf32>
    %c2_240 = arith.constant 2 : index
    %c0_241 = arith.constant 0 : index
    %161 = vector.load %arg11[%c2_240, %c0_241] : memref<8x8xf32, #tpu.memory_space<vmem>>, vector<2x8xf32>
    tpu.vector_store %arg11[%c2_240, %c0_241], %160 {strides = array<i32>} : memref<8x8xf32, #tpu.memory_space<vmem>>, vector<2x8xf32>,
    %c6_242 = arith.constant 6 : index
    %c72_243 = arith.constant 72 : index
    %162 = vector.load %arg9[%c6_242, %c72_243] : memref<8x96xf32, #tpu.memory_space<vmem>>, vector<2x8xf32>
    %c2_244 = arith.constant 2 : index
    %c0_245 = arith.constant 0 : index
    %163 = vector.load %arg12[%c2_244, %c0_245] : memref<8x8xf32, #tpu.memory_space<vmem>>, vector<2x8xf32>
    tpu.vector_store %arg12[%c2_244, %c0_245], %162 {strides = array<i32>} : memref<8x8xf32, #tpu.memory_space<vmem>>, vector<2x8xf32>,
    %c6_246 = arith.constant 6 : index
    %c16_247 = arith.constant 16 : index
    %164 = vector.load %arg9[%c6_246, %c16_247] : memref<8x96xf32, #tpu.memory_space<vmem>>, vector<2x8xf32>
    %c4_248 = arith.constant 4 : index
    %c0_249 = arith.constant 0 : index
    %165 = vector.load %arg10[%c4_248, %c0_249] : memref<8x8xf32, #tpu.memory_space<vmem>>, vector<2x8xf32>
    tpu.vector_store %arg10[%c4_248, %c0_249], %164 {strides = array<i32>} : memref<8x8xf32, #tpu.memory_space<vmem>>, vector<2x8xf32>,
    %c6_250 = arith.constant 6 : index
    %c48_251 = arith.constant 48 : index
    %166 = vector.load %arg9[%c6_250, %c48_251] : memref<8x96xf32, #tpu.memory_space<vmem>>, vector<2x8xf32>
    %c4_252 = arith.constant 4 : index
    %c0_253 = arith.constant 0 : index
    %167 = vector.load %arg11[%c4_252, %c0_253] : memref<8x8xf32, #tpu.memory_space<vmem>>, vector<2x8xf32>
    tpu.vector_store %arg11[%c4_252, %c0_253], %166 {strides = array<i32>} : memref<8x8xf32, #tpu.memory_space<vmem>>, vector<2x8xf32>,
    %c6_254 = arith.constant 6 : index
    %c80_255 = arith.constant 80 : index
    %168 = vector.load %arg9[%c6_254, %c80_255] : memref<8x96xf32, #tpu.memory_space<vmem>>, vector<2x8xf32>
    %c4_256 = arith.constant 4 : index
    %c0_257 = arith.constant 0 : index
    %169 = vector.load %arg12[%c4_256, %c0_257] : memref<8x8xf32, #tpu.memory_space<vmem>>, vector<2x8xf32>
    tpu.vector_store %arg12[%c4_256, %c0_257], %168 {strides = array<i32>} : memref<8x8xf32, #tpu.memory_space<vmem>>, vector<2x8xf32>,
    %c6_258 = arith.constant 6 : index
    %c24_259 = arith.constant 24 : index
    %170 = vector.load %arg9[%c6_258, %c24_259] : memref<8x96xf32, #tpu.memory_space<vmem>>, vector<2x8xf32>
    %c6_260 = arith.constant 6 : index
    %c0_261 = arith.constant 0 : index
    %171 = vector.load %arg10[%c6_260, %c0_261] : memref<8x8xf32, #tpu.memory_space<vmem>>, vector<2x8xf32>
    tpu.vector_store %arg10[%c6_260, %c0_261], %170 {strides = array<i32>} : memref<8x8xf32, #tpu.memory_space<vmem>>, vector<2x8xf32>,
    %c6_262 = arith.constant 6 : index
    %c56_263 = arith.constant 56 : index
    %172 = vector.load %arg9[%c6_262, %c56_263] : memref<8x96xf32, #tpu.memory_space<vmem>>, vector<2x8xf32>
    %c6_264 = arith.constant 6 : index
    %c0_265 = arith.constant 0 : index
    %173 = vector.load %arg11[%c6_264, %c0_265] : memref<8x8xf32, #tpu.memory_space<vmem>>, vector<2x8xf32>
    tpu.vector_store %arg11[%c6_264, %c0_265], %172 {strides = array<i32>} : memref<8x8xf32, #tpu.memory_space<vmem>>, vector<2x8xf32>,
    %c6_266 = arith.constant 6 : index
    %c88_267 = arith.constant 88 : index
    %174 = vector.load %arg9[%c6_266, %c88_267] : memref<8x96xf32, #tpu.memory_space<vmem>>, vector<2x8xf32>
    %c6_268 = arith.constant 6 : index
    %c0_269 = arith.constant 0 : index
    %175 = vector.load %arg12[%c6_268, %c0_269] : memref<8x8xf32, #tpu.memory_space<vmem>>, vector<2x8xf32>
    tpu.vector_store %arg12[%c6_268, %c0_269], %174 {strides = array<i32>} : memref<8x8xf32, #tpu.memory_space<vmem>>, vector<2x8xf32>,
    %c0_270 = arith.constant 0 : index
    %c0_271 = arith.constant 0 : index
    %176 = vector.load %arg10[%c0_270, %c0_271] : memref<8x8xf32, #tpu.memory_space<vmem>>, vector<8x8xf32>
    %c0_272 = arith.constant 0 : index
    %c0_273 = arith.constant 0 : index
    %177 = vector.load %arg11[%c0_272, %c0_273] : memref<8x8xf32, #tpu.memory_space<vmem>>, vector<8x8xf32>
    %c0_274 = arith.constant 0 : index
    %c0_275 = arith.constant 0 : index
    %178 = vector.load %arg12[%c0_274, %c0_275] : memref<8x8xf32, #tpu.memory_space<vmem>>, vector<8x8xf32>
    %cst_276 = arith.constant dense<0.000000e+00> : vector<8x8xf32>
    %179 = tpu.matmul %176, %177, %cst_276 {dimension_numbers = #tpu.dot_dimension_numbers<[1], [1], [0], [0], [0, 0, 1, 0], [], []>} : vector<8x8xf32>, vector<8x8xf32>, vector<8x8xf32> -> vector<8x8xf32>
    %cst_277 = arith.constant dense<0xFF800000> : vector<8xf32>
    %180 = vector.multi_reduction <maximumf>, %179, %cst_277 [1] : vector<8x8xf32> to vector<8xf32>
    %181 = vector.shape_cast %180 : vector<8xf32> to vector<8x1xf32>
    %182 = vector.broadcast %181 : vector<8x1xf32> to vector<8x8xf32>
    %183 = arith.subf %179, %182 : vector<8x8xf32>
    %184 = math.exp %183 : vector<8x8xf32>
    %cst_278 = arith.constant dense<0.000000e+00> : vector<8xf32>
    %185 = vector.multi_reduction <add>, %184, %cst_278 [1] : vector<8x8xf32> to vector<8xf32>
    %186 = vector.shape_cast %185 : vector<8xf32> to vector<8x1xf32>
    %187 = tpu.reciprocal %186 {approx = true} : vector<8x1xf32> -> vector<8x1xf32>
    %188 = vector.broadcast %187 : vector<8x1xf32> to vector<8x8xf32>
    %189 = arith.mulf %184, %188 : vector<8x8xf32>
    %cst_279 = arith.constant dense<0.000000e+00> : vector<8x8xf32>
    %190 = tpu.matmul %189, %178, %cst_279 {dimension_numbers = #tpu.dot_dimension_numbers<[1], [0], [0], [1], [0, 0, 1, 1], [], []>} : vector<8x8xf32>, vector<8x8xf32>, vector<8x8xf32> -> vector<8x8xf32>
    %c0_280 = arith.constant 0 : index
    %c0_281 = arith.constant 0 : index
    %191 = vector.load %arg13[%c0_280, %c0_281] : memref<8x8xf32, #tpu.memory_space<vmem>>, vector<8x8xf32>
    tpu.vector_store %arg13[%c0_280, %c0_281], %190 {strides = array<i32>} : memref<8x8xf32, #tpu.memory_space<vmem>>, vector<8x8xf32>,
    %c0_282 = arith.constant 0 : index
    %c0_283 = arith.constant 0 : index
    %192 = vector.load %arg13[%c0_282, %c0_283] : memref<8x8xf32, #tpu.memory_space<vmem>>, vector<2x8xf32>
    %c6_284 = arith.constant 6 : index
    %c0_285 = arith.constant 0 : index
    %193 = vector.load %arg14[%c6_284, %c0_285] : memref<8x32xf32, #tpu.memory_space<vmem>>, vector<2x8xf32>
    tpu.vector_store %arg14[%c6_284, %c0_285], %192 {strides = array<i32>} : memref<8x32xf32, #tpu.memory_space<vmem>>, vector<2x8xf32>,
    %c2_286 = arith.constant 2 : index
    %c0_287 = arith.constant 0 : index
    %194 = vector.load %arg13[%c2_286, %c0_287] : memref<8x8xf32, #tpu.memory_space<vmem>>, vector<2x8xf32>
    %c6_288 = arith.constant 6 : index
    %c8_289 = arith.constant 8 : index
    %195 = vector.load %arg14[%c6_288, %c8_289] : memref<8x32xf32, #tpu.memory_space<vmem>>, vector<2x8xf32>
    tpu.vector_store %arg14[%c6_288, %c8_289], %194 {strides = array<i32>} : memref<8x32xf32, #tpu.memory_space<vmem>>, vector<2x8xf32>,
    %c4_290 = arith.constant 4 : index
    %c0_291 = arith.constant 0 : index
    %196 = vector.load %arg13[%c4_290, %c0_291] : memref<8x8xf32, #tpu.memory_space<vmem>>, vector<2x8xf32>
    %c6_292 = arith.constant 6 : index
    %c16_293 = arith.constant 16 : index
    %197 = vector.load %arg14[%c6_292, %c16_293] : memref<8x32xf32, #tpu.memory_space<vmem>>, vector<2x8xf32>
    tpu.vector_store %arg14[%c6_292, %c16_293], %196 {strides = array<i32>} : memref<8x32xf32, #tpu.memory_space<vmem>>, vector<2x8xf32>,
    %c6_294 = arith.constant 6 : index
    %c0_295 = arith.constant 0 : index
    %198 = vector.load %arg13[%c6_294, %c0_295] : memref<8x8xf32, #tpu.memory_space<vmem>>, vector<2x8xf32>
    %c6_296 = arith.constant 6 : index
    %c24_297 = arith.constant 24 : index
    %199 = vector.load %arg14[%c6_296, %c24_297] : memref<8x32xf32, #tpu.memory_space<vmem>>, vector<2x8xf32>
    tpu.vector_store %arg14[%c6_296, %c24_297], %198 {strides = array<i32>} : memref<8x32xf32, #tpu.memory_space<vmem>>, vector<2x8xf32>,
    %c0_298 = arith.constant 0 : index
    %c0_299 = arith.constant 0 : index
    %200 = vector.load %arg14[%c0_298, %c0_299] : memref<8x32xf32, #tpu.memory_space<vmem>>, vector<8x32xf32>
    %c0_300 = arith.constant 0 : index
    %c0_301 = arith.constant 0 : index
    %201 = vector.load %arg4[%c0_300, %c0_301] : memref<32x32xf32, #tpu.memory_space<vmem>>, vector<32x32xf32>
    %cst_302 = arith.constant dense<0.000000e+00> : vector<8x32xf32>
    %202 = tpu.matmul %200, %201, %cst_302 {dimension_numbers = #tpu.dot_dimension_numbers<[1], [0], [0], [1], [0, 0, 1, 1], [], []>} : vector<8x32xf32>, vector<32x32xf32>, vector<8x32xf32> -> vector<8x32xf32>
    %c0_303 = arith.constant 0 : index
    %c0_304 = arith.constant 0 : index
    %203 = vector.load %arg5[%c0_303, %c0_304] : memref<1x32xf32, #tpu.memory_space<vmem>>, vector<1x32xf32>
    %204 = vector.broadcast %203 : vector<1x32xf32> to vector<8x32xf32>
    %205 = arith.addf %202, %204 : vector<8x32xf32>
    %206 = arith.addf %205, %1 : vector<8x32xf32>
    %cst_305 = arith.constant dense<0.000000e+00> : vector<8xf32>
    %207 = vector.multi_reduction <add>, %206, %cst_305 [1] : vector<8x32xf32> to vector<8xf32>
    %208 = vector.shape_cast %207 : vector<8xf32> to vector<8x1xf32>
    %cst_306 = arith.constant 3.200000e+01 : f32
    %209 = vector.broadcast %cst_306 : f32 to vector<8x1xf32>
    %210 = arith.divf %208, %209 : vector<8x1xf32>
    %211 = arith.mulf %206, %206 : vector<8x32xf32>
    %cst_307 = arith.constant dense<0.000000e+00> : vector<8xf32>
    %212 = vector.multi_reduction <add>, %211, %cst_307 [1] : vector<8x32xf32> to vector<8xf32>
    %213 = vector.shape_cast %212 : vector<8xf32> to vector<8x1xf32>
    %cst_308 = arith.constant 3.200000e+01 : f32
    %214 = vector.broadcast %cst_308 : f32 to vector<8x1xf32>
    %215 = arith.divf %213, %214 : vector<8x1xf32>
    %216 = arith.mulf %210, %210 : vector<8x1xf32>
    %217 = arith.subf %215, %216 : vector<8x1xf32>
    %218 = vector.broadcast %210 : vector<8x1xf32> to vector<8x32xf32>
    %219 = arith.subf %206, %218 : vector<8x32xf32>
    %cst_309 = arith.constant 9.99999974E-6 : f32
    %220 = vector.broadcast %cst_309 : f32 to vector<8x1xf32>
    %221 = arith.addf %217, %220 : vector<8x1xf32>
    %222 = math.rsqrt %221 : vector<8x1xf32>
    %223 = vector.broadcast %222 : vector<8x1xf32> to vector<8x32xf32>
    %224 = arith.mulf %219, %223 : vector<8x32xf32>
    %c0_310 = arith.constant 0 : index
    %c0_311 = arith.constant 0 : index
    %225 = vector.load %arg6[%c0_310, %c0_311] : memref<1x32xf32, #tpu.memory_space<vmem>>, vector<1x32xf32>
    %226 = vector.broadcast %225 : vector<1x32xf32> to vector<8x32xf32>
    %227 = arith.mulf %224, %226 : vector<8x32xf32>
    %c0_312 = arith.constant 0 : index
    %c0_313 = arith.constant 0 : index
    %228 = vector.load %arg7[%c0_312, %c0_313] : memref<1x32xf32, #tpu.memory_space<vmem>>, vector<1x32xf32>
    %229 = vector.broadcast %228 : vector<1x32xf32> to vector<8x32xf32>
    %230 = arith.addf %227, %229 : vector<8x32xf32>
    %c0_314 = arith.constant 0 : index
    %c0_315 = arith.constant 0 : index
    %c0_316 = arith.constant 0 : index
    %231 = vector.load %arg8[%c0_314, %c0_315, %c0_316] : memref<1x8x32xf32, #tpu.memory_space<vmem>>, vector<1x8x32xf32>
    %232 = vector.shape_cast %231 : vector<1x8x32xf32> to vector<8x32xf32>
    %233 = vector.shape_cast %230 : vector<8x32xf32> to vector<1x8x32xf32>
    tpu.vector_store %arg8[%c0_314, %c0_315, %c0_316], %233 {strides = array<i32>} : memref<1x8x32xf32, #tpu.memory_space<vmem>>, vector<1x8x32xf32>,
    return
  }
  func.func @transform_0(%arg0: i32) -> (i32, i32, i32) {
    %c0_i32 = arith.constant 0 : i32
    %c0_i32_0 = arith.constant 0 : i32
    %c0_i32_1 = arith.constant 0 : i32
    return %arg0, %c0_i32, %c0_i32_0 : i32, i32, i32
  }
  func.func @transform_1(%arg0: i32) -> (i32, i32) {
    %c0_i32 = arith.constant 0 : i32
    %c0_i32_0 = arith.constant 0 : i32
    %c0_i32_1 = arith.constant 0 : i32
    return %c0_i32, %c0_i32_0 : i32, i32
  }
  func.func @transform_2(%arg0: i32) -> (i32, i32) {
    %c0_i32 = arith.constant 0 : i32
    %c0_i32_0 = arith.constant 0 : i32
    %c0_i32_1 = arith.constant 0 : i32
    return %c0_i32, %c0_i32_0 : i32, i32
  }
  func.func @transform_3(%arg0: i32) -> (i32, i32) {
    %c0_i32 = arith.constant 0 : i32
    %c0_i32_0 = arith.constant 0 : i32
    %c0_i32_1 = arith.constant 0 : i32
    return %c0_i32, %c0_i32_0 : i32, i32
  }
  func.func @transform_4(%arg0: i32) -> (i32, i32) {
    %c0_i32 = arith.constant 0 : i32
    %c0_i32_0 = arith.constant 0 : i32
    %c0_i32_1 = arith.constant 0 : i32
    return %c0_i32, %c0_i32_0 : i32, i32
  }
  func.func @transform_5(%arg0: i32) -> (i32, i32) {
    %c0_i32 = arith.constant 0 : i32
    %c0_i32_0 = arith.constant 0 : i32
    %c0_i32_1 = arith.constant 0 : i32
    return %c0_i32, %c0_i32_0 : i32, i32
  }
  func.func @transform_6(%arg0: i32) -> (i32, i32) {
    %c0_i32 = arith.constant 0 : i32
    %c0_i32_0 = arith.constant 0 : i32
    %c0_i32_1 = arith.constant 0 : i32
    return %c0_i32, %c0_i32_0 : i32, i32
  }
  func.func @transform_7(%arg0: i32) -> (i32, i32, i32) {
    %c0_i32 = arith.constant 0 : i32
    %c0_i32_0 = arith.constant 0 : i32
    %c0_i32_1 = arith.constant 0 : i32
    return %arg0, %c0_i32, %c0_i32_0 : i32, i32, i32
  }
}

</mosaic_0001>

<llo_original>
// kernel: tpu_custom_call.1
$region0: #{tpu_custom_call.1}
  #allocation0 [shape = 'u32[]', space=smem, size = 0x4, offset = 0x4, fixed_abs, tag = 'smem constant byte address 0x4 - core index']
  #allocation1 [shape = 'u32[144,128]{1,0:T(1,128)}', space=vmem, size = 0x12000, scoped, tag = 'internal scratch']
  #allocation2 [shape = 'f32[8,96]{1,0:T(8,128)}', space=vmem, size = 0x1000, scoped, tag = 'scratch operand']
  #allocation3 [shape = 'f32[8,8]{1,0:T(8,128)}', space=vmem, size = 0x1000, scoped, tag = 'scratch operand']
  #allocation4 [shape = 'f32[8,8]{1,0:T(8,128)}', space=vmem, size = 0x1000, scoped, tag = 'scratch operand']
  #allocation5 [shape = 'f32[8,8]{1,0:T(8,128)}', space=vmem, size = 0x1000, scoped, tag = 'scratch operand']
  #allocation6 [shape = 'f32[8,8]{1,0:T(8,128)}', space=vmem, size = 0x1000, scoped, tag = 'scratch operand']
  #allocation7 [shape = 'f32[8,32]{1,0:T(8,128)}', space=vmem, size = 0x1000, scoped, tag = 'scratch operand']
  %s0 = inlined_call_operand.hbm [shape: f32[2,8,32], index: 0, kind: input, shape index: {}]
  %s1 = inlined_call_operand.hbm [shape: f32[32,96], index: 1, kind: input, shape index: {}]
  %s2 = inlined_call_operand.vmem [shape: f32[1,96], index: 2, kind: input, shape index: {}]
  %s3 = inlined_call_operand.hbm [shape: f32[32,32], index: 3, kind: input, shape index: {}]
  %s4 = inlined_call_operand.vmem [shape: f32[1,32], index: 4, kind: input, shape index: {}]
  %s5 = inlined_call_operand.vmem [shape: f32[1,32], index: 5, kind: input, shape index: {}]
  %s6 = inlined_call_operand.vmem [shape: f32[1,32], index: 6, kind: input, shape index: {}]
  %s7 = inlined_call_operand.hbm [shape: f32[2,8,32], index: 7, kind: output, shape index: {}]
  %s8 = sld [smem:[#allocation0]]
  $region73: #{tpu_custom_call.1} parent=0
    _
  %s10 = ssub.s32 1, %s8
  %s11 = scalar_select 0, %s10, %s8
  $region1: #{tpu_custom_call.1} parent=0
    #allocation8 [shape = 'u8[8192]{0}', space=vmem, size = 0x2000, scoped, tag = 'input window, operand 0']
    #allocation9 [shape = 's32[2]{0}', space=sflag, size = 0x8, scoped, tag = 'scoped memory for tpu_custom_call.1']
    #allocation10 [shape = 's32[2]{0}', space=sflag, size = 0x8, scoped, tag = 'scoped memory for tpu_custom_call.1']
    #allocation11 [shape = 'u8[16384]{0}', space=vmem, size = 0x4000, scoped, tag = 'input window, operand 1, single buffered']
    #allocation12 [shape = 's32[1]{0}', space=sflag, size = 0x4, scoped, tag = 'scoped memory for tpu_custom_call.1']
    #allocation13 [shape = 'u8[16384]{0}', space=vmem, size = 0x4000, scoped, tag = 'input window, operand 3, single buffered']
    #allocation14 [shape = 'u8[8192]{0}', space=vmem, size = 0x2000, scoped, tag = 'output window, operand 0']
    %12 = vsyncpa [#allocation9], 0
    %s13 = scalar_lea.sflag [#allocation9], 1
    %14 = vsyncpa %s13, 0
    %15 = vsyncpa [#allocation12], 0
    %16 = vsyncpa [#allocation10], 0
    %s17 = scalar_lea.sflag [#allocation10], 1
    %18 = vsyncpa %s17, 0
    loop: start=0, step=1, limit=4
    $region2: #{tpu_custom_call.1} parent=1 // loop_pre_header
      _
    $region3: #{tpu_custom_call.1} parent=1 // loop_header
      %s20 = sphi 0, %s24
      %p21 = scmp.ge.s32.totalorder %s20, 4
      %s30 = sphi 0, %s32
      %s33 = sphi 0, %s30
      %s34 = sphi 0, %s33
      %s50 = sphi 0, %s34
      %s54 = sphi 0, %s54
      %s56 = sphi 0, %s54
      %s57 = sphi 0, %s56
      %s71 = sphi 0, %s57
      %s75 = sphi 0, %s75
      %s77 = sphi 0, %s75
      %s78 = sphi 0, %s77
      %s92 = sphi 0, %s78
      %s96 = sphi 0, %s96
      %s98 = sphi 0, %s96
      %s99 = sphi 0, %s98
      %s113 = sphi 0, %s99
      %s117 = sphi 0, %s117
      %s119 = sphi 0, %s117
      %s120 = sphi 0, %s119
      %s134 = sphi 0, %s120
      %s138 = sphi 0, %s138
      %s140 = sphi 0, %s138
      %s141 = sphi 0, %s140
      %s155 = sphi 0, %s141
      %s159 = sphi 0, %s159
      %s161 = sphi 0, %s159
      %s162 = sphi 0, %s161
      %s176 = sphi 0, %s162
      %s182 = sphi 0, %s184
      %s185 = sphi 0, %s182
      %s186 = sphi 0, %s185
      %s202 = sphi 0, %s186
    $region4: #{tpu_custom_call.1} parent=1 // loop_header_branch
      %23 = sbr.rel (%p21) target = $region8
    $region5: #{tpu_custom_call.1} parent=1 // loop_body
      %s25 = ssub.s32 %s20, 1
      %s26 = ssub.s32 %s20, 2
      %s27 = sadd.s32 %s20, 1
      %s28 = ssub.s32 %s20, %s27
      %p29 = scmp.eq.s32.totalorder %s28, 0
      %s31 = sadd.s32 %s30, 1
      %s32 = scalar_select %p29, %s30, %s31
      %p35 = pneg %p29
      %p36 = scmp.eq.s32.totalorder %s20, 1
      %p37 = por %p35, %p36
      %p38 = scmp.ne.s32.totalorder %s30, %s33
      %p39 = scmp.eq.s32.totalorder %s20, 0
      %p40 = por %p38, %p39
      %p41 = scmp.ne.s32.totalorder %s30, %s33
      %p42 = scmp.eq.s32.totalorder %s25, 1
      %p43 = por %p41, %p42
      %p44 = scmp.ne.s32.totalorder %s33, %s34
      %p45 = scmp.eq.s32.totalorder %s25, 0
      %p46 = por %p44, %p45
      %p47 = scmp.ne.s32.totalorder %s33, %s34
      %p48 = scmp.eq.s32.totalorder %s26, 1
      %p49 = por %p47, %p48
      %p51 = scmp.ne.s32.totalorder %s34, %s50
      %p52 = scmp.eq.s32.totalorder %s26, 0
      %p53 = por %p51, %p52
      %s55 = sadd.s32 %s54, 1
      %p58 = scmp.eq.s32.totalorder %s20, 1
      %p59 = scmp.ne.s32.totalorder %s54, %s56
      %p60 = scmp.eq.s32.totalorder %s20, 0
      %p61 = por %p59, %p60
      %p62 = scmp.ne.s32.totalorder %s54, %s56
      %p63 = scmp.eq.s32.totalorder %s25, 1
      %p64 = por %p62, %p63
      %p65 = scmp.ne.s32.totalorder %s56, %s57
      %p66 = scmp.eq.s32.totalorder %s25, 0
      %p67 = por %p65, %p66
      %p68 = scmp.ne.s32.totalorder %s56, %s57
      %p69 = scmp.eq.s32.totalorder %s26, 1
      %p70 = por %p68, %p69
      %p72 = scmp.ne.s32.totalorder %s57, %s71
      %p73 = scmp.eq.s32.totalorder %s26, 0
      %p74 = por %p72, %p73
      %s76 = sadd.s32 %s75, 1
      %p79 = scmp.eq.s32.totalorder %s20, 1
      %p80 = scmp.ne.s32.totalorder %s75, %s77
      %p81 = scmp.eq.s32.totalorder %s20, 0
      %p82 = por %p80, %p81
      %p83 = scmp.ne.s32.totalorder %s75, %s77
      %p84 = scmp.eq.s32.totalorder %s25, 1
      %p85 = por %p83, %p84
      %p86 = scmp.ne.s32.totalorder %s77, %s78
      %p87 = scmp.eq.s32.totalorder %s25, 0
      %p88 = por %p86, %p87
      %p89 = scmp.ne.s32.totalorder %s77, %s78
      %p90 = scmp.eq.s32.totalorder %s26, 1
      %p91 = por %p89, %p90
      %p93 = scmp.ne.s32.totalorder %s78, %s92
      %p94 = scmp.eq.s32.totalorder %s26, 0
      %p95 = por %p93, %p94
      %s97 = sadd.s32 %s96, 1
      %p100 = scmp.eq.s32.totalorder %s20, 1
      %p101 = scmp.ne.s32.totalorder %s96, %s98
      %p102 = scmp.eq.s32.totalorder %s20, 0
      %p103 = por %p101, %p102
      %p104 = scmp.ne.s32.totalorder %s96, %s98
      %p105 = scmp.eq.s32.totalorder %s25, 1
      %p106 = por %p104, %p105
      %p107 = scmp.ne.s32.totalorder %s98, %s99
      %p108 = scmp.eq.s32.totalorder %s25, 0
      %p109 = por %p107, %p108
      %p110 = scmp.ne.s32.totalorder %s98, %s99
      %p111 = scmp.eq.s32.totalorder %s26, 1
      %p112 = por %p110, %p111
      %p114 = scmp.ne.s32.totalorder %s99, %s113
      %p115 = scmp.eq.s32.totalorder %s26, 0
      %p116 = por %p114, %p115
      %s118 = sadd.s32 %s117, 1
      %p121 = scmp.eq.s32.totalorder %s20, 1
      %p122 = scmp.ne.s32.totalorder %s117, %s119
      %p123 = scmp.eq.s32.totalorder %s20, 0
      %p124 = por %p122, %p123
      %p125 = scmp.ne.s32.totalorder %s117, %s119
      %p126 = scmp.eq.s32.totalorder %s25, 1
      %p127 = por %p125, %p126
      %p128 = scmp.ne.s32.totalorder %s119, %s120
      %p129 = scmp.eq.s32.totalorder %s25, 0
      %p130 = por %p128, %p129
      %p131 = scmp.ne.s32.totalorder %s119, %s120
      %p132 = scmp.eq.s32.totalorder %s26, 1
      %p133 = por %p131, %p132
      %p135 = scmp.ne.s32.totalorder %s120, %s134
      %p136 = scmp.eq.s32.totalorder %s26, 0
      %p137 = por %p135, %p136
      %s139 = sadd.s32 %s138, 1
      %p142 = scmp.eq.s32.totalorder %s20, 1
      %p143 = scmp.ne.s32.totalorder %s138, %s140
      %p144 = scmp.eq.s32.totalorder %s20, 0
      %p145 = por %p143, %p144
      %p146 = scmp.ne.s32.totalorder %s138, %s140
      %p147 = scmp.eq.s32.totalorder %s25, 1
      %p148 = por %p146, %p147
      %p149 = scmp.ne.s32.totalorder %s140, %s141
      %p150 = scmp.eq.s32.totalorder %s25, 0
      %p151 = por %p149, %p150
      %p152 = scmp.ne.s32.totalorder %s140, %s141
      %p153 = scmp.eq.s32.totalorder %s26, 1
      %p154 = por %p152, %p153
      %p156 = scmp.ne.s32.totalorder %s141, %s155
      %p157 = scmp.eq.s32.totalorder %s26, 0
      %p158 = por %p156, %p157
      %s160 = sadd.s32 %s159, 1
      %p163 = scmp.eq.s32.totalorder %s20, 1
      %p164 = scmp.ne.s32.totalorder %s159, %s161
      %p165 = scmp.eq.s32.totalorder %s20, 0
      %p166 = por %p164, %p165
      %p167 = scmp.ne.s32.totalorder %s159, %s161
      %p168 = scmp.eq.s32.totalorder %s25, 1
      %p169 = por %p167, %p168
      %p170 = scmp.ne.s32.totalorder %s161, %s162
      %p171 = scmp.eq.s32.totalorder %s25, 0
      %p172 = por %p170, %p171
      %p173 = scmp.ne.s32.totalorder %s161, %s162
      %p174 = scmp.eq.s32.totalorder %s26, 1
      %p175 = por %p173, %p174
      %p177 = scmp.ne.s32.totalorder %s162, %s176
      %p178 = scmp.eq.s32.totalorder %s26, 0
      %p179 = por %p177, %p178
      %s180 = ssub.s32 %s20, %s27
      %p181 = scmp.eq.s32.totalorder %s180, 0
      %s183 = sadd.s32 %s182, 1
      %s184 = scalar_select %p181, %s182, %s183
      %p187 = pneg %p181
      %p188 = scmp.eq.s32.totalorder %s20, 1
      %p189 = por %p187, %p188
      %p190 = scmp.ne.s32.totalorder %s182, %s185
      %p191 = scmp.eq.s32.totalorder %s20, 0
      %p192 = por %p190, %p191
      %p193 = scmp.ne.s32.totalorder %s182, %s185
      %p194 = scmp.eq.s32.totalorder %s25, 1
      %p195 = por %p193, %p194
      %p196 = scmp.ne.s32.totalorder %s185, %s186
      %p197 = scmp.eq.s32.totalorder %s25, 0
      %p198 = por %p196, %p197
      %p199 = scmp.ne.s32.totalorder %s185, %s186
      %p200 = scmp.eq.s32.totalorder %s26, 1
      %p201 = por %p199, %p200
      %p203 = scmp.ne.s32.totalorder %s186, %s202
      %p204 = scmp.eq.s32.totalorder %s26, 0
      %p205 = por %p203, %p204
      %p206 = scmp.le.s32.totalorder 1, %s20
      %p207 = scmp.lt.s32.totalorder %s20, 3
      %p208 = pnand %p206, %p207
      %p209 = pneg %p208
      // Predicated region
      $region9: #{tpu_custom_call.1} parent=5 // pred_check
        _
      $region10: #{tpu_custom_call.1} parent=5 // pred_check_branch
        %211 = sbr.rel (%p208) target = $region12
      $region11: #{tpu_custom_call.1} parent=5 // pred_region
        %s212 = ssub.s32 %s20, 1
        // Predicated region
        $region13: #{tpu_custom_call.1} parent=11 // pred_check
          %p213 = pneg %p67
        $region14: #{tpu_custom_call.1} parent=11 // pred_check_branch
          %215 = sbr.rel (%p213) target = $region16
        $region15: #{tpu_custom_call.1} parent=11 // pred_region
          %s217 = ssub.s32 512, 512
          %218 = vsyncadd [#allocation12], %s217
          %s219 = sshll.u32 [#allocation11], 4
          %s220 = int_to_ptr.vmem [resolvable:$true] %s219
          %225 = dma.hbm_to_vmem [thread:$0]  %s1, 512, %s220, [#allocation12], 128, 128, 8
        $region16: #{tpu_custom_call.1} parent=11 // pred_fallthru
          _
        // Predicated region
        $region17: #{tpu_custom_call.1} parent=11 // pred_check
          %p226 = pneg %p88
        $region18: #{tpu_custom_call.1} parent=11 // pred_check_branch
          %228 = sbr.rel (%p226) target = $region20
        $region19: #{tpu_custom_call.1} parent=11 // pred_region
          _
        $region20: #{tpu_custom_call.1} parent=11 // pred_fallthru
          _
        // Predicated region
        $region21: #{tpu_custom_call.1} parent=11 // pred_check
          %p229 = pneg %p109
        $region22: #{tpu_custom_call.1} parent=11 // pred_check_branch
          %231 = sbr.rel (%p229) target = $region24
        $region23: #{tpu_custom_call.1} parent=11 // pred_region
          %s233 = ssub.s32 512, 512
          %234 = vsyncadd [#allocation12], %s233
          %s235 = sshll.u32 [#allocation13], 4
          %s236 = int_to_ptr.vmem [resolvable:$true] %s235
          %241 = dma.hbm_to_vmem [thread:$0]  %s3, 512, %s236, [#allocation12], 128, 128, 8
        $region24: #{tpu_custom_call.1} parent=11 // pred_fallthru
          _
        // Predicated region
        $region25: #{tpu_custom_call.1} parent=11 // pred_check
          %p242 = pneg %p130
        $region26: #{tpu_custom_call.1} parent=11 // pred_check_branch
          %244 = sbr.rel (%p242) target = $region28
        $region27: #{tpu_custom_call.1} parent=11 // pred_region
          _
        $region28: #{tpu_custom_call.1} parent=11 // pred_fallthru
          _
        // Predicated region
        $region29: #{tpu_custom_call.1} parent=11 // pred_check
          %p245 = pneg %p151
        $region30: #{tpu_custom_call.1} parent=11 // pred_check_branch
          %247 = sbr.rel (%p245) target = $region32
        $region31: #{tpu_custom_call.1} parent=11 // pred_region
          _
        $region32: #{tpu_custom_call.1} parent=11 // pred_fallthru
          _
        // Predicated region
        $region33: #{tpu_custom_call.1} parent=11 // pred_check
          %p248 = pneg %p172
        $region34: #{tpu_custom_call.1} parent=11 // pred_check_branch
          %250 = sbr.rel (%p248) target = $region36
        $region35: #{tpu_custom_call.1} parent=11 // pred_region
          _
        $region36: #{tpu_custom_call.1} parent=11 // pred_fallthru
          _
      $region12: #{tpu_custom_call.1} parent=5 // pred_fallthru
        _
      %p251 = scmp.lt.s32.totalorder %s20, 2
      // Predicated region
      $region37: #{tpu_custom_call.1} parent=5 // pred_check
        %p252 = pneg %p251
      $region38: #{tpu_custom_call.1} parent=5 // pred_check_branch
        %254 = sbr.rel (%p252) target = $region40
      $region39: #{tpu_custom_call.1} parent=5 // pred_region
        // Predicated region
        $region41: #{tpu_custom_call.1} parent=39 // pred_check
          %p255 = pneg %p40
        $region42: #{tpu_custom_call.1} parent=39 // pred_check_branch
          %257 = sbr.rel (%p255) target = $region44
        $region43: #{tpu_custom_call.1} parent=39 // pred_region
          %s258 = sand.u32 %s30, 1
          %s259 = scalar_lea.sflag [#allocation9], %s258
          %s260 = sand.u32 %s30, 1
          %s261 = smul.addr %s260, 8
          %s262 = scalar_lea.vmem [#allocation8], %s261
          %s264 = ssub.s32 128, 128
          %265 = vsyncadd %s259, %s264
          %s266 = smul.addr %s20, 128
          %s267 = scalar_lea.hbm %s0, %s266
          %s269 = sshll.u32 %s262, 4
          %s270 = int_to_ptr.vmem [resolvable:$true] %s269
          %272 = dma.hbm_to_vmem [thread:$0]  %s267, 128, %s270, %s259
        $region44: #{tpu_custom_call.1} parent=39 // pred_fallthru
          _
      $region40: #{tpu_custom_call.1} parent=5 // pred_fallthru
        _
      %p273 = scmp.le.s32.totalorder 1, %s20
      %p274 = scmp.lt.s32.totalorder %s20, 3
      %p275 = pnand %p273, %p274
      %p276 = pneg %p275
      // Predicated region
      $region45: #{tpu_custom_call.1} parent=5 // pred_check
        _
      $region46: #{tpu_custom_call.1} parent=5 // pred_check_branch
        %278 = sbr.rel (%p275) target = $region48
      $region47: #{tpu_custom_call.1} parent=5 // pred_region
        %s279 = ssub.s32 %s20, 1
        %s280 = sand.u32 %s33, 1
        %s281 = scalar_lea.sflag [#allocation9], %s280
        %s282 = sand.u32 %s33, 1
        %s283 = smul.addr %s282, 8
        %s284 = scalar_lea.vmem [#allocation8], %s283
        // Predicated region
        $region49: #{tpu_custom_call.1} parent=47 // pred_check
          %p285 = pneg %p46
        $region50: #{tpu_custom_call.1} parent=47 // pred_check_branch
          %287 = sbr.rel (%p285) target = $region52
        $region51: #{tpu_custom_call.1} parent=47 // pred_region
          %288 = dma.done %s281, 128
        $region52: #{tpu_custom_call.1} parent=47 // pred_fallthru
          _
        // Predicated region
        $region53: #{tpu_custom_call.1} parent=47 // pred_check
          %p289 = pneg %p67
        $region54: #{tpu_custom_call.1} parent=47 // pred_check_branch
          %291 = sbr.rel (%p289) target = $region56
        $region55: #{tpu_custom_call.1} parent=47 // pred_region
          %292 = dma.done [#allocation12], 512
        $region56: #{tpu_custom_call.1} parent=47 // pred_fallthru
          _
        // Predicated region
        $region57: #{tpu_custom_call.1} parent=47 // pred_check
          %p293 = pneg %p109
        $region58: #{tpu_custom_call.1} parent=47 // pred_check_branch
          %295 = sbr.rel (%p293) target = $region60
        $region59: #{tpu_custom_call.1} parent=47 // pred_region
          %296 = dma.done [#allocation12], 512
        $region60: #{tpu_custom_call.1} parent=47 // pred_fallthru
          _
        %s297 = sand.u32 %s33, 1
        %s298 = scalar_lea.sflag [#allocation9], %s297
        %s299 = sand.u32 %s33, 1
        %s300 = smul.addr %s299, 8
        %s301 = scalar_lea.vmem [#allocation8], %s300
        %p302 = pneg %p46
        %p303 = pneg %p43
        %p304 = pneg %p67
        %p305 = pneg %p64
        %p306 = pneg %p88
        %p307 = pneg %p85
        %p308 = pneg %p109
        %p309 = pneg %p106
        %p310 = pneg %p130
        %p311 = pneg %p127
        %p312 = pneg %p151
        %p313 = pneg %p148
        %p314 = pneg %p172
        %p315 = pneg %p169
        %p316 = pneg %p198
        %p317 = pneg %p195
        %s318 = sand.u32 %s185, 1
        %s319 = scalar_lea.sflag [#allocation10], %s318
        %s320 = sand.u32 %s185, 1
        %s321 = smul.addr %s320, 8
        %s322 = scalar_lea.vmem [#allocation14], %s321
        %v323 = vld [vmem:[%s284] sm:$0xff]
        %v324 = vld [vmem:[#allocation11] sm:$0xff]
        %v325 = vld [vmem:[#allocation11 + $0x8] sm:$0xff]
        %v326 = vld [vmem:[#allocation11 + $0x10] sm:$0xff]
        %v327 = vld [vmem:[#allocation11 + $0x18] sm:$0xff]
        %v328 = vld [vmem:[%s2] sm:$0x1]
        %v330 = vlaneseq
        %v331 = vshrl.u32 %v330, 7
        %v332 = vsub.s32 0, %v331
        %v333 = vrot.slane %v328, %v332
        %vm335 = vcmask 261120
        %v337 = vsel %vm335, %v323, 0
        %339 = vmatprep.subr.mxu0 0.0
        %340 = vmatpush1.msra.mxu0 %v324
        %341 = vmatprep.subr.mxu0 0.0
        %342 = vmatpush1.msra.mxu0 %v325
        %343 = vmatprep.subr.mxu0 0.0
        %344 = vmatpush1.msra.mxu0 %v326
        %345 = vmatprep.subr.mxu0 0.0
        %346 = vmatpush1.msra.mxu0 %v327
        %347 = vmatprep.subr.mxu0 0.0
        %348 = vmatpush1.msra.mxu0 0.0
        %349 = vmatprep.subr.mxu0 0.0
        %350 = vmatpush1.msra.mxu0 0.0
        %351 = vmatprep.subr.mxu0 0.0
        %352 = vmatpush1.msra.mxu0 0.0
        %353 = vmatprep.subr.mxu0 0.0
        %354 = vmatpush1.msra.mxu0 0.0
        %355 = vmatprep.subr.mxu0 0.0
        %356 = vmatpush1.msra.mxu0 0.0
        %357 = vmatprep.subr.mxu0 0.0
        %358 = vmatpush1.msra.mxu0 0.0
        %359 = vmatprep.subr.mxu0 0.0
        %360 = vmatpush1.msra.mxu0 0.0
        %361 = vmatprep.subr.mxu0 0.0
        %362 = vmatpush1.msra.mxu0 0.0
        %363 = vmatprep.subr.mxu0 0.0
        %364 = vmatpush1.msra.mxu0 0.0
        %365 = vmatprep.subr.mxu0 0.0
        %366 = vmatpush1.msra.mxu0 0.0
        %367 = vmatprep.subr.mxu0 0.0
        %368 = vmatpush1.msra.mxu0 0.0
        %369 = vmatprep.subr.mxu0 0.0
        %370 = vmatpush1.msra.mxu0 0.0
        %371 = vmatprep.subr.mxu0 0.0
        %372 = vmatpush1.msra.mxu0 0.0
        %373 = vmatprep.subr.mxu0 0.0
        %374 = vmatpush1.msra.mxu0 0.0
        %375 = vmatprep.subr.mxu0 0.0
        %376 = vmatpush1.msra.mxu0 0.0
        %377 = vmatprep.subr.mxu0 0.0
        %378 = vmatpush1.msra.mxu0 0.0
        %379 = vmatprep.subr.mxu0 0.0
        %380 = vmatpush1.msra.mxu0 0.0
        %381 = vmatprep.subr.mxu0 0.0
        %382 = vmatpush1.msra.mxu0 0.0
        %383 = vmatprep.subr.mxu0 0.0
        %384 = vmatpush1.msra.mxu0 0.0
        %385 = vmatprep.subr.mxu0 0.0
        %386 = vmatpush1.msra.mxu0 0.0
        %387 = vmatprep.subr.mxu0 0.0
        %388 = vmatpush1.msra.mxu0 0.0
        %389 = vmatprep.subr.mxu0 0.0
        %390 = vmatpush1.msra.mxu0 0.0
        %391 = vmatprep.subr.mxu0 0.0
        %392 = vmatpush1.msra.mxu0 0.0
        %393 = vmatprep.subr.mxu0 0.0
        %394 = vmatpush1.msra.mxu0 0.0
        %395 = vmatprep.subr.mxu0 0.0
        %396 = vmatpush1.msra.mxu0 0.0
        %397 = vmatprep.subr.mxu0 0.0
        %398 = vmatpush1.msra.mxu0 0.0
        %399 = vmatprep.subr.mxu0 0.0
        %400 = vmatpush1.msra.mxu0 0.0
        %401 = vmatprep.subr.mxu0 0.0
        %402 = vmatpush1.msra.mxu0 0.0
        %403 = vmatprep.mubr.f32.mxu0 0.0
        %404 = vmatmul.mubr.f32.gmra.mrb[0].mxu0 %v337
        %v405 = vpop.f32.mrb[0].mxu0
        %v406 = vadd.f32 %v333, %v405
        %v407 = vpop.f32.mrb[0].mxu0
        %408 = vdwg.mxu0
        %vm409 = vcmask 785408
        %410 = vst.msk [vmem:[#allocation2] sm:$0xff] %vm409, %v406
        %v411 = vld [vmem:[#allocation2] sm:$0x3]
        %vm412 = vcmask 58368
        %413 = vst.msk [vmem:[#allocation3] sm:$0x3] %vm412, %v411
        %v414 = vld [vmem:[#allocation2] sm:$0x3]
        %416 = vrot.lane.b32.xlu0 %v414, 96
        %v417 = vpop.permute.xlu0 %416
        %419 = vst.msk [vmem:[#allocation4] sm:$0x3] %vm412, %v417
        %v420 = vld [vmem:[#allocation2] sm:$0x3]
        %422 = vrot.lane.b32.xlu0 %v420, 64
        %v423 = vpop.permute.xlu0 %422
        %425 = vst.msk [vmem:[#allocation5] sm:$0x3] %vm412, %v423
        %v426 = vld [vmem:[#allocation2] sm:$0x3]
        %428 = vrot.lane.b32.xlu0 %v426, 120
        %v429 = vpop.permute.xlu0 %428
        %431 = vst.msk [vmem:[#allocation3 + $0x2] sm:$0x3] %vm412, %v429
        %v432 = vld [vmem:[#allocation2] sm:$0x3]
        %434 = vrot.lane.b32.xlu0 %v432, 88
        %v435 = vpop.permute.xlu0 %434
        %437 = vst.msk [vmem:[#allocation4 + $0x2] sm:$0x3] %vm412, %v435
        %v438 = vld [vmem:[#allocation2] sm:$0x3]
        %440 = vrot.lane.b32.xlu0 %v438, 56
        %v441 = vpop.permute.xlu0 %440
        %443 = vst.msk [vmem:[#allocation5 + $0x2] sm:$0x3] %vm412, %v441
        %v444 = vld [vmem:[#allocation2] sm:$0x3]
        %446 = vrot.lane.b32.xlu0 %v444, 112
        %v447 = vpop.permute.xlu0 %446
        %449 = vst.msk [vmem:[#allocation3 + $0x4] sm:$0x3] %vm412, %v447
        %v450 = vld [vmem:[#allocation2] sm:$0x3]
        %452 = vrot.lane.b32.xlu0 %v450, 80
        %v453 = vpop.permute.xlu0 %452
        %455 = vst.msk [vmem:[#allocation4 + $0x4] sm:$0x3] %vm412, %v453
        %v456 = vld [vmem:[#allocation2] sm:$0x3]
        %458 = vrot.lane.b32.xlu0 %v456, 48
        %v459 = vpop.permute.xlu0 %458
        %461 = vst.msk [vmem:[#allocation5 + $0x4] sm:$0x3] %vm412, %v459
        %v462 = vld [vmem:[#allocation2] sm:$0x3]
        %464 = vrot.lane.b32.xlu0 %v462, 104
        %v465 = vpop.permute.xlu0 %464
        %467 = vst.msk [vmem:[#allocation3 + $0x6] sm:$0x3] %vm412, %v465
        %v468 = vld [vmem:[#allocation2] sm:$0x3]
        %470 = vrot.lane.b32.xlu0 %v468, 72
        %v471 = vpop.permute.xlu0 %470
        %473 = vst.msk [vmem:[#allocation4 + $0x6] sm:$0x3] %vm412, %v471
        %v474 = vld [vmem:[#allocation2] sm:$0x3]
        %476 = vrot.lane.b32.xlu0 %v474, 40
        %v477 = vpop.permute.xlu0 %476
        %479 = vst.msk [vmem:[#allocation5 + $0x6] sm:$0x3] %vm412, %v477
        %v480 = vld [vmem:[#allocation3] sm:$0xff]
        %v481 = vld [vmem:[#allocation4] sm:$0xff]
        %v482 = vld [vmem:[#allocation5] sm:$0xff]
        %vm483 = vcmask 64512
        %v485 = vsel %vm483, %v480, 0
        %v488 = vsel %vm483, %v481, 0
        %490 = vmatprep.subr.mxu0 0.0
        %491 = vmatpush1.xpose.msra.mxu0 %v488
        %492 = vmatprep.subr.mxu0 0.0
        %493 = vmatpush1.xpose.msra.mxu0 0.0
        %494 = vmatprep.subr.mxu0 0.0
        %495 = vmatpush1.xpose.msra.mxu0 0.0
        %496 = vmatprep.subr.mxu0 0.0
        %497 = vmatpush1.xpose.msra.mxu0 0.0
        %498 = vmatprep.subr.mxu0 0.0
        %499 = vmatpush1.xpose.msra.mxu0 0.0
        %500 = vmatprep.subr.mxu0 0.0
        %501 = vmatpush1.xpose.msra.mxu0 0.0
        %502 = vmatprep.subr.mxu0 0.0
        %503 = vmatpush1.xpose.msra.mxu0 0.0
        %504 = vmatprep.subr.mxu0 0.0
        %505 = vmatpush1.xpose.msra.mxu0 0.0
        %506 = vmatprep.subr.mxu0 0.0
        %507 = vmatpush1.xpose.msra.mxu0 0.0
        %508 = vmatprep.subr.mxu0 0.0
        %509 = vmatpush1.xpose.msra.mxu0 0.0
        %510 = vmatprep.subr.mxu0 0.0
        %511 = vmatpush1.xpose.msra.mxu0 0.0
        %512 = vmatprep.subr.mxu0 0.0
        %513 = vmatpush1.xpose.msra.mxu0 0.0
        %514 = vmatprep.subr.mxu0 0.0
        %515 = vmatpush1.xpose.msra.mxu0 0.0
        %516 = vmatprep.subr.mxu0 0.0
        %517 = vmatpush1.xpose.msra.mxu0 0.0
        %518 = vmatprep.subr.mxu0 0.0
        %519 = vmatpush1.xpose.msra.mxu0 0.0
        %520 = vmatprep.subr.mxu0 0.0
        %521 = vmatpush1.xpose.msra.mxu0 0.0
        %522 = vmatprep.subr.mxu0 0.0
        %523 = vmatpush1.xpose.msra.mxu0 0.0
        %524 = vmatprep.subr.mxu0 0.0
        %525 = vmatpush1.xpose.msra.mxu0 0.0
        %526 = vmatprep.subr.mxu0 0.0
        %527 = vmatpush1.xpose.msra.mxu0 0.0
        %528 = vmatprep.subr.mxu0 0.0
        %529 = vmatpush1.xpose.msra.mxu0 0.0
        %530 = vmatprep.subr.mxu0 0.0
        %531 = vmatpush1.xpose.msra.mxu0 0.0
        %532 = vmatprep.subr.mxu0 0.0
        %533 = vmatpush1.xpose.msra.mxu0 0.0
        %534 = vmatprep.subr.mxu0 0.0
        %535 = vmatpush1.xpose.msra.mxu0 0.0
        %536 = vmatprep.subr.mxu0 0.0
        %537 = vmatpush1.xpose.msra.mxu0 0.0
        %538 = vmatprep.subr.mxu0 0.0
        %539 = vmatpush1.xpose.msra.mxu0 0.0
        %540 = vmatprep.subr.mxu0 0.0
        %541 = vmatpush1.xpose.msra.mxu0 0.0
        %542 = vmatprep.subr.mxu0 0.0
        %543 = vmatpush1.xpose.msra.mxu0 0.0
        %544 = vmatprep.subr.mxu0 0.0
        %545 = vmatpush1.xpose.msra.mxu0 0.0
        %546 = vmatprep.subr.mxu0 0.0
        %547 = vmatpush1.xpose.msra.mxu0 0.0
        %548 = vmatprep.subr.mxu0 0.0
        %549 = vmatpush1.xpose.msra.mxu0 0.0
        %550 = vmatprep.subr.mxu0 0.0
        %551 = vmatpush1.xpose.msra.mxu0 0.0
        %552 = vmatprep.subr.mxu0 0.0
        %553 = vmatpush1.xpose.msra.mxu0 0.0
        %554 = vmatprep.mubr.f32.mxu0 0.0
        %555 = vmatmul.mubr.f32.gmra.mrb[0].mxu0 %v485
        %v556 = vpop.f32.mrb[0].mxu0
        %v557 = vadd.f32 0.0, %v556
        %v558 = vpop.f32.mrb[0].mxu0
        %559 = vdwg.mxu0
        %v560 = vsel %vm483, %v557, -inf
        %561 = vmax.xlane.f32.xlu0 %v560
        %v562 = vpop.xlane.xlu0 %561
        %v563 = vsub.f32 %v557, %v562
        %v564 = vmul.f32 %v563, 1.442695
        %v565 = vpow.pop %v564
        %v566 = vsel %vm483, %v565, 0.0
        %567 = vadd.xlane.f32.xlu0 %v566
        %v568 = vpop.xlane.xlu0 %567
        %v569 = vrcp.pop %v568
        %v570 = vmul.f32 %v565, %v569
        %v572 = vsel %vm483, %v570, 0
        %574 = vmatprep.subr.mxu0 0.0
        %575 = vmatpush1.msra.mxu0 %v482
        %576 = vmatprep.subr.mxu0 0.0
        %577 = vmatpush1.msra.mxu0 0.0
        %578 = vmatprep.subr.mxu0 0.0
        %579 = vmatpush1.msra.mxu0 0.0
        %580 = vmatprep.subr.mxu0 0.0
        %581 = vmatpush1.msra.mxu0 0.0
        %582 = vmatprep.subr.mxu0 0.0
        %583 = vmatpush1.msra.mxu0 0.0
        %584 = vmatprep.subr.mxu0 0.0
        %585 = vmatpush1.msra.mxu0 0.0
        %586 = vmatprep.subr.mxu0 0.0
        %587 = vmatpush1.msra.mxu0 0.0
        %588 = vmatprep.subr.mxu0 0.0
        %589 = vmatpush1.msra.mxu0 0.0
        %590 = vmatprep.subr.mxu0 0.0
        %591 = vmatpush1.msra.mxu0 0.0
        %592 = vmatprep.subr.mxu0 0.0
        %593 = vmatpush1.msra.mxu0 0.0
        %594 = vmatprep.subr.mxu0 0.0
        %595 = vmatpush1.msra.mxu0 0.0
        %596 = vmatprep.subr.mxu0 0.0
        %597 = vmatpush1.msra.mxu0 0.0
        %598 = vmatprep.subr.mxu0 0.0
        %599 = vmatpush1.msra.mxu0 0.0
        %600 = vmatprep.subr.mxu0 0.0
        %601 = vmatpush1.msra.mxu0 0.0
        %602 = vmatprep.subr.mxu0 0.0
        %603 = vmatpush1.msra.mxu0 0.0
        %604 = vmatprep.subr.mxu0 0.0
        %605 = vmatpush1.msra.mxu0 0.0
        %606 = vmatprep.subr.mxu0 0.0
        %607 = vmatpush1.msra.mxu0 0.0
        %608 = vmatprep.subr.mxu0 0.0
        %609 = vmatpush1.msra.mxu0 0.0
        %610 = vmatprep.subr.mxu0 0.0
        %611 = vmatpush1.msra.mxu0 0.0
        %612 = vmatprep.subr.mxu0 0.0
        %613 = vmatpush1.msra.mxu0 0.0
        %614 = vmatprep.subr.mxu0 0.0
        %615 = vmatpush1.msra.mxu0 0.0
        %616 = vmatprep.subr.mxu0 0.0
        %617 = vmatpush1.msra.mxu0 0.0
        %618 = vmatprep.subr.mxu0 0.0
        %619 = vmatpush1.msra.mxu0 0.0
        %620 = vmatprep.subr.mxu0 0.0
        %621 = vmatpush1.msra.mxu0 0.0
        %622 = vmatprep.subr.mxu0 0.0
        %623 = vmatpush1.msra.mxu0 0.0
        %624 = vmatprep.subr.mxu0 0.0
        %625 = vmatpush1.msra.mxu0 0.0
        %626 = vmatprep.subr.mxu0 0.0
        %627 = vmatpush1.msra.mxu0 0.0
        %628 = vmatprep.subr.mxu0 0.0
        %629 = vmatpush1.msra.mxu0 0.0
        %630 = vmatprep.subr.mxu0 0.0
        %631 = vmatpush1.msra.mxu0 0.0
        %632 = vmatprep.subr.mxu0 0.0
        %633 = vmatpush1.msra.mxu0 0.0
        %634 = vmatprep.subr.mxu0 0.0
        %635 = vmatpush1.msra.mxu0 0.0
        %636 = vmatprep.subr.mxu0 0.0
        %637 = vmatpush1.msra.mxu0 0.0
        %638 = vmatprep.mubr.f32.mxu0 0.0
        %639 = vmatmul.mubr.f32.gmra.mrb[0].mxu0 %v572
        %v640 = vpop.f32.mrb[0].mxu0
        %v641 = vadd.f32 0.0, %v640
        %v642 = vpop.f32.mrb[0].mxu0
        %643 = vdwg.mxu0
        %644 = vst.msk [vmem:[#allocation6] sm:$0xff] %vm483, %v641
        %v645 = vld [vmem:[#allocation6] sm:$0x3]
        %646 = vst.msk [vmem:[#allocation7] sm:$0x3] %vm412, %v645
        %v647 = vld [vmem:[#allocation6 + $0x2] sm:$0x3]
        %649 = vrot.lane.b32.xlu0 %v647, 8
        %v650 = vpop.permute.xlu0 %649
        %vm652 = vcmask 123968
        %653 = vst.msk [vmem:[#allocation7] sm:$0x3] %vm652, %v650
        %v654 = vld [vmem:[#allocation6 + $0x4] sm:$0x3]
        %656 = vrot.lane.b32.xlu0 %v654, 16
        %v657 = vpop.permute.xlu0 %656
        %vm659 = vcmask 189568
        %660 = vst.msk [vmem:[#allocation7] sm:$0x3] %vm659, %v657
        %v661 = vld [vmem:[#allocation6 + $0x6] sm:$0x3]
        %663 = vrot.lane.b32.xlu0 %v661, 24
        %v664 = vpop.permute.xlu0 %663
        %vm666 = vcmask 255168
        %667 = vst.msk [vmem:[#allocation7] sm:$0x3] %vm666, %v664
        %v668 = vld [vmem:[#allocation2 + $0x2] sm:$0x3]
        %669 = vst.msk [vmem:[#allocation3] sm:$0x3] %vm412, %v668
        %v670 = vld [vmem:[#allocation2 + $0x2] sm:$0x3]
        %672 = vrot.lane.b32.xlu0 %v670, 96
        %v673 = vpop.permute.xlu0 %672
        %675 = vst.msk [vmem:[#allocation4] sm:$0x3] %vm412, %v673
        %v676 = vld [vmem:[#allocation2 + $0x2] sm:$0x3]
        %678 = vrot.lane.b32.xlu0 %v676, 64
        %v679 = vpop.permute.xlu0 %678
        %681 = vst.msk [vmem:[#allocation5] sm:$0x3] %vm412, %v679
        %v682 = vld [vmem:[#allocation2 + $0x2] sm:$0x3]
        %684 = vrot.lane.b32.xlu0 %v682, 120
        %v685 = vpop.permute.xlu0 %684
        %687 = vst.msk [vmem:[#allocation3 + $0x2] sm:$0x3] %vm412, %v685
        %v688 = vld [vmem:[#allocation2 + $0x2] sm:$0x3]
        %690 = vrot.lane.b32.xlu0 %v688, 88
        %v691 = vpop.permute.xlu0 %690
        %693 = vst.msk [vmem:[#allocation4 + $0x2] sm:$0x3] %vm412, %v691
        %v694 = vld [vmem:[#allocation2 + $0x2] sm:$0x3]
        %696 = vrot.lane.b32.xlu0 %v694, 56
        %v697 = vpop.permute.xlu0 %696
        %699 = vst.msk [vmem:[#allocation5 + $0x2] sm:$0x3] %vm412, %v697
        %v700 = vld [vmem:[#allocation2 + $0x2] sm:$0x3]
        %702 = vrot.lane.b32.xlu0 %v700, 112
        %v703 = vpop.permute.xlu0 %702
        %705 = vst.msk [vmem:[#allocation3 + $0x4] sm:$0x3] %vm412, %v703
        %v706 = vld [vmem:[#allocation2 + $0x2] sm:$0x3]
        %708 = vrot.lane.b32.xlu0 %v706, 80
        %v709 = vpop.permute.xlu0 %708
        %711 = vst.msk [vmem:[#allocation4 + $0x4] sm:$0x3] %vm412, %v709
        %v712 = vld [vmem:[#allocation2 + $0x2] sm:$0x3]
        %714 = vrot.lane.b32.xlu0 %v712, 48
        %v715 = vpop.permute.xlu0 %714
        %717 = vst.msk [vmem:[#allocation5 + $0x4] sm:$0x3] %vm412, %v715
        %v718 = vld [vmem:[#allocation2 + $0x2] sm:$0x3]
        %720 = vrot.lane.b32.xlu0 %v718, 104
        %v721 = vpop.permute.xlu0 %720
        %723 = vst.msk [vmem:[#allocation3 + $0x6] sm:$0x3] %vm412, %v721
        %v724 = vld [vmem:[#allocation2 + $0x2] sm:$0x3]
        %726 = vrot.lane.b32.xlu0 %v724, 72
        %v727 = vpop.permute.xlu0 %726
        %729 = vst.msk [vmem:[#allocation4 + $0x6] sm:$0x3] %vm412, %v727
        %v730 = vld [vmem:[#allocation2 + $0x2] sm:$0x3]
        %732 = vrot.lane.b32.xlu0 %v730, 40
        %v733 = vpop.permute.xlu0 %732
        %735 = vst.msk [vmem:[#allocation5 + $0x6] sm:$0x3] %vm412, %v733
        %v736 = vld [vmem:[#allocation3] sm:$0xff]
        %v737 = vld [vmem:[#allocation4] sm:$0xff]
        %v738 = vld [vmem:[#allocation5] sm:$0xff]
        %v740 = vsel %vm483, %v736, 0
        %v743 = vsel %vm483, %v737, 0
        %745 = vmatprep.subr.mxu0 0.0
        %746 = vmatpush1.xpose.msra.mxu0 %v743
        %747 = vmatprep.subr.mxu0 0.0
        %748 = vmatpush1.xpose.msra.mxu0 0.0
        %749 = vmatprep.subr.mxu0 0.0
        %750 = vmatpush1.xpose.msra.mxu0 0.0
        %751 = vmatprep.subr.mxu0 0.0
        %752 = vmatpush1.xpose.msra.mxu0 0.0
        %753 = vmatprep.subr.mxu0 0.0
        %754 = vmatpush1.xpose.msra.mxu0 0.0
        %755 = vmatprep.subr.mxu0 0.0
        %756 = vmatpush1.xpose.msra.mxu0 0.0
        %757 = vmatprep.subr.mxu0 0.0
        %758 = vmatpush1.xpose.msra.mxu0 0.0
        %759 = vmatprep.subr.mxu0 0.0
        %760 = vmatpush1.xpose.msra.mxu0 0.0
        %761 = vmatprep.subr.mxu0 0.0
        %762 = vmatpush1.xpose.msra.mxu0 0.0
        %763 = vmatprep.subr.mxu0 0.0
        %764 = vmatpush1.xpose.msra.mxu0 0.0
        %765 = vmatprep.subr.mxu0 0.0
        %766 = vmatpush1.xpose.msra.mxu0 0.0
        %767 = vmatprep.subr.mxu0 0.0
        %768 = vmatpush1.xpose.msra.mxu0 0.0
        %769 = vmatprep.subr.mxu0 0.0
        %770 = vmatpush1.xpose.msra.mxu0 0.0
        %771 = vmatprep.subr.mxu0 0.0
        %772 = vmatpush1.xpose.msra.mxu0 0.0
        %773 = vmatprep.subr.mxu0 0.0
        %774 = vmatpush1.xpose.msra.mxu0 0.0
        %775 = vmatprep.subr.mxu0 0.0
        %776 = vmatpush1.xpose.msra.mxu0 0.0
        %777 = vmatprep.subr.mxu0 0.0
        %778 = vmatpush1.xpose.msra.mxu0 0.0
        %779 = vmatprep.subr.mxu0 0.0
        %780 = vmatpush1.xpose.msra.mxu0 0.0
        %781 = vmatprep.subr.mxu0 0.0
        %782 = vmatpush1.xpose.msra.mxu0 0.0
        %783 = vmatprep.subr.mxu0 0.0
        %784 = vmatpush1.xpose.msra.mxu0 0.0
        %785 = vmatprep.subr.mxu0 0.0
        %786 = vmatpush1.xpose.msra.mxu0 0.0
        %787 = vmatprep.subr.mxu0 0.0
        %788 = vmatpush1.xpose.msra.mxu0 0.0
        %789 = vmatprep.subr.mxu0 0.0
        %790 = vmatpush1.xpose.msra.mxu0 0.0
        %791 = vmatprep.subr.mxu0 0.0
        %792 = vmatpush1.xpose.msra.mxu0 0.0
        %793 = vmatprep.subr.mxu0 0.0
        %794 = vmatpush1.xpose.msra.mxu0 0.0
        %795 = vmatprep.subr.mxu0 0.0
        %796 = vmatpush1.xpose.msra.mxu0 0.0
        %797 = vmatprep.subr.mxu0 0.0
        %798 = vmatpush1.xpose.msra.mxu0 0.0
        %799 = vmatprep.subr.mxu0 0.0
        %800 = vmatpush1.xpose.msra.mxu0 0.0
        %801 = vmatprep.subr.mxu0 0.0
        %802 = vmatpush1.xpose.msra.mxu0 0.0
        %803 = vmatprep.subr.mxu0 0.0
        %804 = vmatpush1.xpose.msra.mxu0 0.0
        %805 = vmatprep.subr.mxu0 0.0
        %806 = vmatpush1.xpose.msra.mxu0 0.0
        %807 = vmatprep.subr.mxu0 0.0
        %808 = vmatpush1.xpose.msra.mxu0 0.0
        %809 = vmatprep.mubr.f32.mxu0 0.0
        %810 = vmatmul.mubr.f32.gmra.mrb[0].mxu0 %v740
        %v811 = vpop.f32.mrb[0].mxu0
        %v812 = vadd.f32 0.0, %v811
        %v813 = vpop.f32.mrb[0].mxu0
        %814 = vdwg.mxu0
        %v815 = vsel %vm483, %v812, -inf
        %816 = vmax.xlane.f32.xlu0 %v815
        %v817 = vpop.xlane.xlu0 %816
        %v818 = vsub.f32 %v812, %v817
        %v819 = vmul.f32 %v818, 1.442695
        %v820 = vpow.pop %v819
        %v821 = vsel %vm483, %v820, 0.0
        %822 = vadd.xlane.f32.xlu0 %v821
        %v823 = vpop.xlane.xlu0 %822
        %v824 = vrcp.pop %v823
        %v825 = vmul.f32 %v820, %v824
        %v827 = vsel %vm483, %v825, 0
        %829 = vmatprep.subr.mxu0 0.0
        %830 = vmatpush1.msra.mxu0 %v738
        %831 = vmatprep.subr.mxu0 0.0
        %832 = vmatpush1.msra.mxu0 0.0
        %833 = vmatprep.subr.mxu0 0.0
        %834 = vmatpush1.msra.mxu0 0.0
        %835 = vmatprep.subr.mxu0 0.0
        %836 = vmatpush1.msra.mxu0 0.0
        %837 = vmatprep.subr.mxu0 0.0
        %838 = vmatpush1.msra.mxu0 0.0
        %839 = vmatprep.subr.mxu0 0.0
        %840 = vmatpush1.msra.mxu0 0.0
        %841 = vmatprep.subr.mxu0 0.0
        %842 = vmatpush1.msra.mxu0 0.0
        %843 = vmatprep.subr.mxu0 0.0
        %844 = vmatpush1.msra.mxu0 0.0
        %845 = vmatprep.subr.mxu0 0.0
        %846 = vmatpush1.msra.mxu0 0.0
        %847 = vmatprep.subr.mxu0 0.0
        %848 = vmatpush1.msra.mxu0 0.0
        %849 = vmatprep.subr.mxu0 0.0
        %850 = vmatpush1.msra.mxu0 0.0
        %851 = vmatprep.subr.mxu0 0.0
        %852 = vmatpush1.msra.mxu0 0.0
        %853 = vmatprep.subr.mxu0 0.0
        %854 = vmatpush1.msra.mxu0 0.0
        %855 = vmatprep.subr.mxu0 0.0
        %856 = vmatpush1.msra.mxu0 0.0
        %857 = vmatprep.subr.mxu0 0.0
        %858 = vmatpush1.msra.mxu0 0.0
        %859 = vmatprep.subr.mxu0 0.0
        %860 = vmatpush1.msra.mxu0 0.0
        %861 = vmatprep.subr.mxu0 0.0
        %862 = vmatpush1.msra.mxu0 0.0
        %863 = vmatprep.subr.mxu0 0.0
        %864 = vmatpush1.msra.mxu0 0.0
        %865 = vmatprep.subr.mxu0 0.0
        %866 = vmatpush1.msra.mxu0 0.0
        %867 = vmatprep.subr.mxu0 0.0
        %868 = vmatpush1.msra.mxu0 0.0
        %869 = vmatprep.subr.mxu0 0.0
        %870 = vmatpush1.msra.mxu0 0.0
        %871 = vmatprep.subr.mxu0 0.0
        %872 = vmatpush1.msra.mxu0 0.0
        %873 = vmatprep.subr.mxu0 0.0
        %874 = vmatpush1.msra.mxu0 0.0
        %875 = vmatprep.subr.mxu0 0.0
        %876 = vmatpush1.msra.mxu0 0.0
        %877 = vmatprep.subr.mxu0 0.0
        %878 = vmatpush1.msra.mxu0 0.0
        %879 = vmatprep.subr.mxu0 0.0
        %880 = vmatpush1.msra.mxu0 0.0
        %881 = vmatprep.subr.mxu0 0.0
        %882 = vmatpush1.msra.mxu0 0.0
        %883 = vmatprep.subr.mxu0 0.0
        %884 = vmatpush1.msra.mxu0 0.0
        %885 = vmatprep.subr.mxu0 0.0
        %886 = vmatpush1.msra.mxu0 0.0
        %887 = vmatprep.subr.mxu0 0.0
        %888 = vmatpush1.msra.mxu0 0.0
        %889 = vmatprep.subr.mxu0 0.0
        %890 = vmatpush1.msra.mxu0 0.0
        %891 = vmatprep.subr.mxu0 0.0
        %892 = vmatpush1.msra.mxu0 0.0
        %893 = vmatprep.mubr.f32.mxu0 0.0
        %894 = vmatmul.mubr.f32.gmra.mrb[0].mxu0 %v827
        %v895 = vpop.f32.mrb[0].mxu0
        %v896 = vadd.f32 0.0, %v895
        %v897 = vpop.f32.mrb[0].mxu0
        %898 = vdwg.mxu0
        %899 = vst.msk [vmem:[#allocation6] sm:$0xff] %vm483, %v896
        %v900 = vld [vmem:[#allocation6] sm:$0x3]
        %901 = vst.msk [vmem:[#allocation7 + $0x2] sm:$0x3] %vm412, %v900
        %v902 = vld [vmem:[#allocation6 + $0x2] sm:$0x3]
        %904 = vrot.lane.b32.xlu0 %v902, 8
        %v905 = vpop.permute.xlu0 %904
        %907 = vst.msk [vmem:[#allocation7 + $0x2] sm:$0x3] %vm652, %v905
        %v908 = vld [vmem:[#allocation6 + $0x4] sm:$0x3]
        %910 = vrot.lane.b32.xlu0 %v908, 16
        %v911 = vpop.permute.xlu0 %910
        %913 = vst.msk [vmem:[#allocation7 + $0x2] sm:$0x3] %vm659, %v911
        %v914 = vld [vmem:[#allocation6 + $0x6] sm:$0x3]
        %916 = vrot.lane.b32.xlu0 %v914, 24
        %v917 = vpop.permute.xlu0 %916
        %919 = vst.msk [vmem:[#allocation7 + $0x2] sm:$0x3] %vm666, %v917
        %v920 = vld [vmem:[#allocation2 + $0x4] sm:$0x3]
        %921 = vst.msk [vmem:[#allocation3] sm:$0x3] %vm412, %v920
        %v922 = vld [vmem:[#allocation2 + $0x4] sm:$0x3]
        %924 = vrot.lane.b32.xlu0 %v922, 96
        %v925 = vpop.permute.xlu0 %924
        %927 = vst.msk [vmem:[#allocation4] sm:$0x3] %vm412, %v925
        %v928 = vld [vmem:[#allocation2 + $0x4] sm:$0x3]
        %930 = vrot.lane.b32.xlu0 %v928, 64
        %v931 = vpop.permute.xlu0 %930
        %933 = vst.msk [vmem:[#allocation5] sm:$0x3] %vm412, %v931
        %v934 = vld [vmem:[#allocation2 + $0x4] sm:$0x3]
        %936 = vrot.lane.b32.xlu0 %v934, 120
        %v937 = vpop.permute.xlu0 %936
        %939 = vst.msk [vmem:[#allocation3 + $0x2] sm:$0x3] %vm412, %v937
        %v940 = vld [vmem:[#allocation2 + $0x4] sm:$0x3]
        %942 = vrot.lane.b32.xlu0 %v940, 88
        %v943 = vpop.permute.xlu0 %942
        %945 = vst.msk [vmem:[#allocation4 + $0x2] sm:$0x3] %vm412, %v943
        %v946 = vld [vmem:[#allocation2 + $0x4] sm:$0x3]
        %948 = vrot.lane.b32.xlu0 %v946, 56
        %v949 = vpop.permute.xlu0 %948
        %951 = vst.msk [vmem:[#allocation5 + $0x2] sm:$0x3] %vm412, %v949
        %v952 = vld [vmem:[#allocation2 + $0x4] sm:$0x3]
        %954 = vrot.lane.b32.xlu0 %v952, 112
        %v955 = vpop.permute.xlu0 %954
        %957 = vst.msk [vmem:[#allocation3 + $0x4] sm:$0x3] %vm412, %v955
        %v958 = vld [vmem:[#allocation2 + $0x4] sm:$0x3]
        %960 = vrot.lane.b32.xlu0 %v958, 80
        %v961 = vpop.permute.xlu0 %960
        %963 = vst.msk [vmem:[#allocation4 + $0x4] sm:$0x3] %vm412, %v961
        %v964 = vld [vmem:[#allocation2 + $0x4] sm:$0x3]
        %966 = vrot.lane.b32.xlu0 %v964, 48
        %v967 = vpop.permute.xlu0 %966
        %969 = vst.msk [vmem:[#allocation5 + $0x4] sm:$0x3] %vm412, %v967
        %v970 = vld [vmem:[#allocation2 + $0x4] sm:$0x3]
        %972 = vrot.lane.b32.xlu0 %v970, 104
        %v973 = vpop.permute.xlu0 %972
        %975 = vst.msk [vmem:[#allocation3 + $0x6] sm:$0x3] %vm412, %v973
        %v976 = vld [vmem:[#allocation2 + $0x4] sm:$0x3]
        %978 = vrot.lane.b32.xlu0 %v976, 72
        %v979 = vpop.permute.xlu0 %978
        %981 = vst.msk [vmem:[#allocation4 + $0x6] sm:$0x3] %vm412, %v979
        %v982 = vld [vmem:[#allocation2 + $0x4] sm:$0x3]
        %984 = vrot.lane.b32.xlu0 %v982, 40
        %v985 = vpop.permute.xlu0 %984
        %987 = vst.msk [vmem:[#allocation5 + $0x6] sm:$0x3] %vm412, %v985
        %v988 = vld [vmem:[#allocation3] sm:$0xff]
        %v989 = vld [vmem:[#allocation4] sm:$0xff]
        %v990 = vld [vmem:[#allocation5] sm:$0xff]
        %v992 = vsel %vm483, %v988, 0
        %v995 = vsel %vm483, %v989, 0
        %997 = vmatprep.subr.mxu0 0.0
        %998 = vmatpush1.xpose.msra.mxu0 %v995
        %999 = vmatprep.subr.mxu0 0.0
        %1000 = vmatpush1.xpose.msra.mxu0 0.0
        %1001 = vmatprep.subr.mxu0 0.0
        %1002 = vmatpush1.xpose.msra.mxu0 0.0
        %1003 = vmatprep.subr.mxu0 0.0
        %1004 = vmatpush1.xpose.msra.mxu0 0.0
        %1005 = vmatprep.subr.mxu0 0.0
        %1006 = vmatpush1.xpose.msra.mxu0 0.0
        %1007 = vmatprep.subr.mxu0 0.0
        %1008 = vmatpush1.xpose.msra.mxu0 0.0
        %1009 = vmatprep.subr.mxu0 0.0
        %1010 = vmatpush1.xpose.msra.mxu0 0.0
        %1011 = vmatprep.subr.mxu0 0.0
        %1012 = vmatpush1.xpose.msra.mxu0 0.0
        %1013 = vmatprep.subr.mxu0 0.0
        %1014 = vmatpush1.xpose.msra.mxu0 0.0
        %1015 = vmatprep.subr.mxu0 0.0
        %1016 = vmatpush1.xpose.msra.mxu0 0.0
        %1017 = vmatprep.subr.mxu0 0.0
        %1018 = vmatpush1.xpose.msra.mxu0 0.0
        %1019 = vmatprep.subr.mxu0 0.0
        %1020 = vmatpush1.xpose.msra.mxu0 0.0
        %1021 = vmatprep.subr.mxu0 0.0
        %1022 = vmatpush1.xpose.msra.mxu0 0.0
        %1023 = vmatprep.subr.mxu0 0.0
        %1024 = vmatpush1.xpose.msra.mxu0 0.0
        %1025 = vmatprep.subr.mxu0 0.0
        %1026 = vmatpush1.xpose.msra.mxu0 0.0
        %1027 = vmatprep.subr.mxu0 0.0
        %1028 = vmatpush1.xpose.msra.mxu0 0.0
        %1029 = vmatprep.subr.mxu0 0.0
        %1030 = vmatpush1.xpose.msra.mxu0 0.0
        %1031 = vmatprep.subr.mxu0 0.0
        %1032 = vmatpush1.xpose.msra.mxu0 0.0
        %1033 = vmatprep.subr.mxu0 0.0
        %1034 = vmatpush1.xpose.msra.mxu0 0.0
        %1035 = vmatprep.subr.mxu0 0.0
        %1036 = vmatpush1.xpose.msra.mxu0 0.0
        %1037 = vmatprep.subr.mxu0 0.0
        %1038 = vmatpush1.xpose.msra.mxu0 0.0
        %1039 = vmatprep.subr.mxu0 0.0
        %1040 = vmatpush1.xpose.msra.mxu0 0.0
        %1041 = vmatprep.subr.mxu0 0.0
        %1042 = vmatpush1.xpose.msra.mxu0 0.0
        %1043 = vmatprep.subr.mxu0 0.0
        %1044 = vmatpush1.xpose.msra.mxu0 0.0
        %1045 = vmatprep.subr.mxu0 0.0
        %1046 = vmatpush1.xpose.msra.mxu0 0.0
        %1047 = vmatprep.subr.mxu0 0.0
        %1048 = vmatpush1.xpose.msra.mxu0 0.0
        %1049 = vmatprep.subr.mxu0 0.0
        %1050 = vmatpush1.xpose.msra.mxu0 0.0
        %1051 = vmatprep.subr.mxu0 0.0
        %1052 = vmatpush1.xpose.msra.mxu0 0.0
        %1053 = vmatprep.subr.mxu0 0.0
        %1054 = vmatpush1.xpose.msra.mxu0 0.0
        %1055 = vmatprep.subr.mxu0 0.0
        %1056 = vmatpush1.xpose.msra.mxu0 0.0
        %1057 = vmatprep.subr.mxu0 0.0
        %1058 = vmatpush1.xpose.msra.mxu0 0.0
        %1059 = vmatprep.subr.mxu0 0.0
        %1060 = vmatpush1.xpose.msra.mxu0 0.0
        %1061 = vmatprep.mubr.f32.mxu0 0.0
        %1062 = vmatmul.mubr.f32.gmra.mrb[0].mxu0 %v992
        %v1063 = vpop.f32.mrb[0].mxu0
        %v1064 = vadd.f32 0.0, %v1063
        %v1065 = vpop.f32.mrb[0].mxu0
        %1066 = vdwg.mxu0
        %v1067 = vsel %vm483, %v1064, -inf
        %1068 = vmax.xlane.f32.xlu0 %v1067
        %v1069 = vpop.xlane.xlu0 %1068
        %v1070 = vsub.f32 %v1064, %v1069
        %v1071 = vmul.f32 %v1070, 1.442695
        %v1072 = vpow.pop %v1071
        %v1073 = vsel %vm483, %v1072, 0.0
        %1074 = vadd.xlane.f32.xlu0 %v1073
        %v1075 = vpop.xlane.xlu0 %1074
        %v1076 = vrcp.pop %v1075
        %v1077 = vmul.f32 %v1072, %v1076
        %v1079 = vsel %vm483, %v1077, 0
        %1081 = vmatprep.subr.mxu0 0.0
        %1082 = vmatpush1.msra.mxu0 %v990
        %1083 = vmatprep.subr.mxu0 0.0
        %1084 = vmatpush1.msra.mxu0 0.0
        %1085 = vmatprep.subr.mxu0 0.0
        %1086 = vmatpush1.msra.mxu0 0.0
        %1087 = vmatprep.subr.mxu0 0.0
        %1088 = vmatpush1.msra.mxu0 0.0
        %1089 = vmatprep.subr.mxu0 0.0
        %1090 = vmatpush1.msra.mxu0 0.0
        %1091 = vmatprep.subr.mxu0 0.0
        %1092 = vmatpush1.msra.mxu0 0.0
        %1093 = vmatprep.subr.mxu0 0.0
        %1094 = vmatpush1.msra.mxu0 0.0
        %1095 = vmatprep.subr.mxu0 0.0
        %1096 = vmatpush1.msra.mxu0 0.0
        %1097 = vmatprep.subr.mxu0 0.0
        %1098 = vmatpush1.msra.mxu0 0.0
        %1099 = vmatprep.subr.mxu0 0.0
        %1100 = vmatpush1.msra.mxu0 0.0
        %1101 = vmatprep.subr.mxu0 0.0
        %1102 = vmatpush1.msra.mxu0 0.0
        %1103 = vmatprep.subr.mxu0 0.0
        %1104 = vmatpush1.msra.mxu0 0.0
        %1105 = vmatprep.subr.mxu0 0.0
        %1106 = vmatpush1.msra.mxu0 0.0
        %1107 = vmatprep.subr.mxu0 0.0
        %1108 = vmatpush1.msra.mxu0 0.0
        %1109 = vmatprep.subr.mxu0 0.0
        %1110 = vmatpush1.msra.mxu0 0.0
        %1111 = vmatprep.subr.mxu0 0.0
        %1112 = vmatpush1.msra.mxu0 0.0
        %1113 = vmatprep.subr.mxu0 0.0
        %1114 = vmatpush1.msra.mxu0 0.0
        %1115 = vmatprep.subr.mxu0 0.0
        %1116 = vmatpush1.msra.mxu0 0.0
        %1117 = vmatprep.subr.mxu0 0.0
        %1118 = vmatpush1.msra.mxu0 0.0
        %1119 = vmatprep.subr.mxu0 0.0
        %1120 = vmatpush1.msra.mxu0 0.0
        %1121 = vmatprep.subr.mxu0 0.0
        %1122 = vmatpush1.msra.mxu0 0.0
        %1123 = vmatprep.subr.mxu0 0.0
        %1124 = vmatpush1.msra.mxu0 0.0
        %1125 = vmatprep.subr.mxu0 0.0
        %1126 = vmatpush1.msra.mxu0 0.0
        %1127 = vmatprep.subr.mxu0 0.0
        %1128 = vmatpush1.msra.mxu0 0.0
        %1129 = vmatprep.subr.mxu0 0.0
        %1130 = vmatpush1.msra.mxu0 0.0
        %1131 = vmatprep.subr.mxu0 0.0
        %1132 = vmatpush1.msra.mxu0 0.0
        %1133 = vmatprep.subr.mxu0 0.0
        %1134 = vmatpush1.msra.mxu0 0.0
        %1135 = vmatprep.subr.mxu0 0.0
        %1136 = vmatpush1.msra.mxu0 0.0
        %1137 = vmatprep.subr.mxu0 0.0
        %1138 = vmatpush1.msra.mxu0 0.0
        %1139 = vmatprep.subr.mxu0 0.0
        %1140 = vmatpush1.msra.mxu0 0.0
        %1141 = vmatprep.subr.mxu0 0.0
        %1142 = vmatpush1.msra.mxu0 0.0
        %1143 = vmatprep.subr.mxu0 0.0
        %1144 = vmatpush1.msra.mxu0 0.0
        %1145 = vmatprep.mubr.f32.mxu0 0.0
        %1146 = vmatmul.mubr.f32.gmra.mrb[0].mxu0 %v1079
        %v1147 = vpop.f32.mrb[0].mxu0
        %v1148 = vadd.f32 0.0, %v1147
        %v1149 = vpop.f32.mrb[0].mxu0
        %1150 = vdwg.mxu0
        %1151 = vst.msk [vmem:[#allocation6] sm:$0xff] %vm483, %v1148
        %v1152 = vld [vmem:[#allocation6] sm:$0x3]
        %1153 = vst.msk [vmem:[#allocation7 + $0x4] sm:$0x3] %vm412, %v1152
        %v1154 = vld [vmem:[#allocation6 + $0x2] sm:$0x3]
        %1156 = vrot.lane.b32.xlu0 %v1154, 8
        %v1157 = vpop.permute.xlu0 %1156
        %1159 = vst.msk [vmem:[#allocation7 + $0x4] sm:$0x3] %vm652, %v1157
        %v1160 = vld [vmem:[#allocation6 + $0x4] sm:$0x3]
        %1162 = vrot.lane.b32.xlu0 %v1160, 16
        %v1163 = vpop.permute.xlu0 %1162
        %1165 = vst.msk [vmem:[#allocation7 + $0x4] sm:$0x3] %vm659, %v1163
        %v1166 = vld [vmem:[#allocation6 + $0x6] sm:$0x3]
        %1168 = vrot.lane.b32.xlu0 %v1166, 24
        %v1169 = vpop.permute.xlu0 %1168
        %1171 = vst.msk [vmem:[#allocation7 + $0x4] sm:$0x3] %vm666, %v1169
        %v1172 = vld [vmem:[#allocation2 + $0x6] sm:$0x3]
        %1173 = vst.msk [vmem:[#allocation3] sm:$0x3] %vm412, %v1172
        %v1174 = vld [vmem:[#allocation2 + $0x6] sm:$0x3]
        %1176 = vrot.lane.b32.xlu0 %v1174, 96
        %v1177 = vpop.permute.xlu0 %1176
        %1179 = vst.msk [vmem:[#allocation4] sm:$0x3] %vm412, %v1177
        %v1180 = vld [vmem:[#allocation2 + $0x6] sm:$0x3]
        %1182 = vrot.lane.b32.xlu0 %v1180, 64
        %v1183 = vpop.permute.xlu0 %1182
        %1185 = vst.msk [vmem:[#allocation5] sm:$0x3] %vm412, %v1183
        %v1186 = vld [vmem:[#allocation2 + $0x6] sm:$0x3]
        %1188 = vrot.lane.b32.xlu0 %v1186, 120
        %v1189 = vpop.permute.xlu0 %1188
        %1191 = vst.msk [vmem:[#allocation3 + $0x2] sm:$0x3] %vm412, %v1189
        %v1192 = vld [vmem:[#allocation2 + $0x6] sm:$0x3]
        %1194 = vrot.lane.b32.xlu0 %v1192, 88
        %v1195 = vpop.permute.xlu0 %1194
        %1197 = vst.msk [vmem:[#allocation4 + $0x2] sm:$0x3] %vm412, %v1195
        %v1198 = vld [vmem:[#allocation2 + $0x6] sm:$0x3]
        %1200 = vrot.lane.b32.xlu0 %v1198, 56
        %v1201 = vpop.permute.xlu0 %1200
        %1203 = vst.msk [vmem:[#allocation5 + $0x2] sm:$0x3] %vm412, %v1201
        %v1204 = vld [vmem:[#allocation2 + $0x6] sm:$0x3]
        %1206 = vrot.lane.b32.xlu0 %v1204, 112
        %v1207 = vpop.permute.xlu0 %1206
        %1209 = vst.msk [vmem:[#allocation3 + $0x4] sm:$0x3] %vm412, %v1207
        %v1210 = vld [vmem:[#allocation2 + $0x6] sm:$0x3]
        %1212 = vrot.lane.b32.xlu0 %v1210, 80
        %v1213 = vpop.permute.xlu0 %1212
        %1215 = vst.msk [vmem:[#allocation4 + $0x4] sm:$0x3] %vm412, %v1213
        %v1216 = vld [vmem:[#allocation2 + $0x6] sm:$0x3]
        %1218 = vrot.lane.b32.xlu0 %v1216, 48
        %v1219 = vpop.permute.xlu0 %1218
        %1221 = vst.msk [vmem:[#allocation5 + $0x4] sm:$0x3] %vm412, %v1219
        %v1222 = vld [vmem:[#allocation2 + $0x6] sm:$0x3]
        %1224 = vrot.lane.b32.xlu0 %v1222, 104
        %v1225 = vpop.permute.xlu0 %1224
        %1227 = vst.msk [vmem:[#allocation3 + $0x6] sm:$0x3] %vm412, %v1225
        %v1228 = vld [vmem:[#allocation2 + $0x6] sm:$0x3]
        %1230 = vrot.lane.b32.xlu0 %v1228, 72
        %v1231 = vpop.permute.xlu0 %1230
        %1233 = vst.msk [vmem:[#allocation4 + $0x6] sm:$0x3] %vm412, %v1231
        %v1234 = vld [vmem:[#allocation2 + $0x6] sm:$0x3]
        %1236 = vrot.lane.b32.xlu0 %v1234, 40
        %v1237 = vpop.permute.xlu0 %1236
        %1239 = vst.msk [vmem:[#allocation5 + $0x6] sm:$0x3] %vm412, %v1237
        %v1240 = vld [vmem:[#allocation3] sm:$0xff]
        %v1241 = vld [vmem:[#allocation4] sm:$0xff]
        %v1242 = vld [vmem:[#allocation5] sm:$0xff]
        %v1244 = vsel %vm483, %v1240, 0
        %v1247 = vsel %vm483, %v1241, 0
        %1249 = vmatprep.subr.mxu0 0.0
        %1250 = vmatpush1.xpose.msra.mxu0 %v1247
        %1251 = vmatprep.subr.mxu0 0.0
        %1252 = vmatpush1.xpose.msra.mxu0 0.0
        %1253 = vmatprep.subr.mxu0 0.0
        %1254 = vmatpush1.xpose.msra.mxu0 0.0
        %1255 = vmatprep.subr.mxu0 0.0
        %1256 = vmatpush1.xpose.msra.mxu0 0.0
        %1257 = vmatprep.subr.mxu0 0.0
        %1258 = vmatpush1.xpose.msra.mxu0 0.0
        %1259 = vmatprep.subr.mxu0 0.0
        %1260 = vmatpush1.xpose.msra.mxu0 0.0
        %1261 = vmatprep.subr.mxu0 0.0
        %1262 = vmatpush1.xpose.msra.mxu0 0.0
        %1263 = vmatprep.subr.mxu0 0.0
        %1264 = vmatpush1.xpose.msra.mxu0 0.0
        %1265 = vmatprep.subr.mxu0 0.0
        %1266 = vmatpush1.xpose.msra.mxu0 0.0
        %1267 = vmatprep.subr.mxu0 0.0
        %1268 = vmatpush1.xpose.msra.mxu0 0.0
        %1269 = vmatprep.subr.mxu0 0.0
        %1270 = vmatpush1.xpose.msra.mxu0 0.0
        %1271 = vmatprep.subr.mxu0 0.0
        %1272 = vmatpush1.xpose.msra.mxu0 0.0
        %1273 = vmatprep.subr.mxu0 0.0
        %1274 = vmatpush1.xpose.msra.mxu0 0.0
        %1275 = vmatprep.subr.mxu0 0.0
        %1276 = vmatpush1.xpose.msra.mxu0 0.0
        %1277 = vmatprep.subr.mxu0 0.0
        %1278 = vmatpush1.xpose.msra.mxu0 0.0
        %1279 = vmatprep.subr.mxu0 0.0
        %1280 = vmatpush1.xpose.msra.mxu0 0.0
        %1281 = vmatprep.subr.mxu0 0.0
        %1282 = vmatpush1.xpose.msra.mxu0 0.0
        %1283 = vmatprep.subr.mxu0 0.0
        %1284 = vmatpush1.xpose.msra.mxu0 0.0
        %1285 = vmatprep.subr.mxu0 0.0
        %1286 = vmatpush1.xpose.msra.mxu0 0.0
        %1287 = vmatprep.subr.mxu0 0.0
        %1288 = vmatpush1.xpose.msra.mxu0 0.0
        %1289 = vmatprep.subr.mxu0 0.0
        %1290 = vmatpush1.xpose.msra.mxu0 0.0
        %1291 = vmatprep.subr.mxu0 0.0
        %1292 = vmatpush1.xpose.msra.mxu0 0.0
        %1293 = vmatprep.subr.mxu0 0.0
        %1294 = vmatpush1.xpose.msra.mxu0 0.0
        %1295 = vmatprep.subr.mxu0 0.0
        %1296 = vmatpush1.xpose.msra.mxu0 0.0
        %1297 = vmatprep.subr.mxu0 0.0
        %1298 = vmatpush1.xpose.msra.mxu0 0.0
        %1299 = vmatprep.subr.mxu0 0.0
        %1300 = vmatpush1.xpose.msra.mxu0 0.0
        %1301 = vmatprep.subr.mxu0 0.0
        %1302 = vmatpush1.xpose.msra.mxu0 0.0
        %1303 = vmatprep.subr.mxu0 0.0
        %1304 = vmatpush1.xpose.msra.mxu0 0.0
        %1305 = vmatprep.subr.mxu0 0.0
        %1306 = vmatpush1.xpose.msra.mxu0 0.0
        %1307 = vmatprep.subr.mxu0 0.0
        %1308 = vmatpush1.xpose.msra.mxu0 0.0
        %1309 = vmatprep.subr.mxu0 0.0
        %1310 = vmatpush1.xpose.msra.mxu0 0.0
        %1311 = vmatprep.subr.mxu0 0.0
        %1312 = vmatpush1.xpose.msra.mxu0 0.0
        %1313 = vmatprep.mubr.f32.mxu0 0.0
        %1314 = vmatmul.mubr.f32.gmra.mrb[0].mxu0 %v1244
        %v1315 = vpop.f32.mrb[0].mxu0
        %v1316 = vadd.f32 0.0, %v1315
        %v1317 = vpop.f32.mrb[0].mxu0
        %1318 = vdwg.mxu0
        %v1319 = vsel %vm483, %v1316, -inf
        %1320 = vmax.xlane.f32.xlu0 %v1319
        %v1321 = vpop.xlane.xlu0 %1320
        %v1322 = vsub.f32 %v1316, %v1321
        %v1323 = vmul.f32 %v1322, 1.442695
        %v1324 = vpow.pop %v1323
        %v1325 = vsel %vm483, %v1324, 0.0
        %1326 = vadd.xlane.f32.xlu0 %v1325
        %v1327 = vpop.xlane.xlu0 %1326
        %v1328 = vrcp.pop %v1327
        %v1329 = vmul.f32 %v1324, %v1328
        %v1331 = vsel %vm483, %v1329, 0
        %1333 = vmatprep.subr.mxu0 0.0
        %1334 = vmatpush1.msra.mxu0 %v1242
        %1335 = vmatprep.subr.mxu0 0.0
        %1336 = vmatpush1.msra.mxu0 0.0
        %1337 = vmatprep.subr.mxu0 0.0
        %1338 = vmatpush1.msra.mxu0 0.0
        %1339 = vmatprep.subr.mxu0 0.0
        %1340 = vmatpush1.msra.mxu0 0.0
        %1341 = vmatprep.subr.mxu0 0.0
        %1342 = vmatpush1.msra.mxu0 0.0
        %1343 = vmatprep.subr.mxu0 0.0
        %1344 = vmatpush1.msra.mxu0 0.0
        %1345 = vmatprep.subr.mxu0 0.0
        %1346 = vmatpush1.msra.mxu0 0.0
        %1347 = vmatprep.subr.mxu0 0.0
        %1348 = vmatpush1.msra.mxu0 0.0
        %1349 = vmatprep.subr.mxu0 0.0
        %1350 = vmatpush1.msra.mxu0 0.0
        %1351 = vmatprep.subr.mxu0 0.0
        %1352 = vmatpush1.msra.mxu0 0.0
        %1353 = vmatprep.subr.mxu0 0.0
        %1354 = vmatpush1.msra.mxu0 0.0
        %1355 = vmatprep.subr.mxu0 0.0
        %1356 = vmatpush1.msra.mxu0 0.0
        %1357 = vmatprep.subr.mxu0 0.0
        %1358 = vmatpush1.msra.mxu0 0.0
        %1359 = vmatprep.subr.mxu0 0.0
        %1360 = vmatpush1.msra.mxu0 0.0
        %1361 = vmatprep.subr.mxu0 0.0
        %1362 = vmatpush1.msra.mxu0 0.0
        %1363 = vmatprep.subr.mxu0 0.0
        %1364 = vmatpush1.msra.mxu0 0.0
        %1365 = vmatprep.subr.mxu0 0.0
        %1366 = vmatpush1.msra.mxu0 0.0
        %1367 = vmatprep.subr.mxu0 0.0
        %1368 = vmatpush1.msra.mxu0 0.0
        %1369 = vmatprep.subr.mxu0 0.0
        %1370 = vmatpush1.msra.mxu0 0.0
        %1371 = vmatprep.subr.mxu0 0.0
        %1372 = vmatpush1.msra.mxu0 0.0
        %1373 = vmatprep.subr.mxu0 0.0
        %1374 = vmatpush1.msra.mxu0 0.0
        %1375 = vmatprep.subr.mxu0 0.0
        %1376 = vmatpush1.msra.mxu0 0.0
        %1377 = vmatprep.subr.mxu0 0.0
        %1378 = vmatpush1.msra.mxu0 0.0
        %1379 = vmatprep.subr.mxu0 0.0
        %1380 = vmatpush1.msra.mxu0 0.0
        %1381 = vmatprep.subr.mxu0 0.0
        %1382 = vmatpush1.msra.mxu0 0.0
        %1383 = vmatprep.subr.mxu0 0.0
        %1384 = vmatpush1.msra.mxu0 0.0
        %1385 = vmatprep.subr.mxu0 0.0
        %1386 = vmatpush1.msra.mxu0 0.0
        %1387 = vmatprep.subr.mxu0 0.0
        %1388 = vmatpush1.msra.mxu0 0.0
        %1389 = vmatprep.subr.mxu0 0.0
        %1390 = vmatpush1.msra.mxu0 0.0
        %1391 = vmatprep.subr.mxu0 0.0
        %1392 = vmatpush1.msra.mxu0 0.0
        %1393 = vmatprep.subr.mxu0 0.0
        %1394 = vmatpush1.msra.mxu0 0.0
        %1395 = vmatprep.subr.mxu0 0.0
        %1396 = vmatpush1.msra.mxu0 0.0
        %1397 = vmatprep.mubr.f32.mxu0 0.0
        %1398 = vmatmul.mubr.f32.gmra.mrb[0].mxu0 %v1331
        %v1399 = vpop.f32.mrb[0].mxu0
        %v1400 = vadd.f32 0.0, %v1399
        %v1401 = vpop.f32.mrb[0].mxu0
        %1402 = vdwg.mxu0
        %1403 = vst.msk [vmem:[#allocation6] sm:$0xff] %vm483, %v1400
        %v1404 = vld [vmem:[#allocation6] sm:$0x3]
        %1405 = vst.msk [vmem:[#allocation7 + $0x6] sm:$0x3] %vm412, %v1404
        %v1406 = vld [vmem:[#allocation6 + $0x2] sm:$0x3]
        %1408 = vrot.lane.b32.xlu0 %v1406, 8
        %v1409 = vpop.permute.xlu0 %1408
        %1411 = vst.msk [vmem:[#allocation7 + $0x6] sm:$0x3] %vm652, %v1409
        %v1412 = vld [vmem:[#allocation6 + $0x4] sm:$0x3]
        %1414 = vrot.lane.b32.xlu0 %v1412, 16
        %v1415 = vpop.permute.xlu0 %1414
        %1417 = vst.msk [vmem:[#allocation7 + $0x6] sm:$0x3] %vm659, %v1415
        %v1418 = vld [vmem:[#allocation6 + $0x6] sm:$0x3]
        %1420 = vrot.lane.b32.xlu0 %v1418, 24
        %v1421 = vpop.permute.xlu0 %1420
        %1423 = vst.msk [vmem:[#allocation7 + $0x6] sm:$0x3] %vm666, %v1421
        %v1424 = vld [vmem:[#allocation7] sm:$0xff]
        %v1425 = vld [vmem:[#allocation13] sm:$0xff]
        %v1426 = vld [vmem:[#allocation13 + $0x8] sm:$0xff]
        %v1427 = vld [vmem:[#allocation13 + $0x10] sm:$0xff]
        %v1428 = vld [vmem:[#allocation13 + $0x18] sm:$0xff]
        %v1429 = vld [vmem:[%s4] sm:$0x1]
        %v1431 = vlaneseq
        %v1432 = vshrl.u32 %v1431, 7
        %v1433 = vsub.s32 0, %v1432
        %v1434 = vrot.slane %v1429, %v1433
        %v1437 = vsel %vm335, %v1424, 0
        %1439 = vmatprep.subr.mxu0 0.0
        %1440 = vmatpush1.msra.mxu0 %v1425
        %1441 = vmatprep.subr.mxu0 0.0
        %1442 = vmatpush1.msra.mxu0 %v1426
        %1443 = vmatprep.subr.mxu0 0.0
        %1444 = vmatpush1.msra.mxu0 %v1427
        %1445 = vmatprep.subr.mxu0 0.0
        %1446 = vmatpush1.msra.mxu0 %v1428
        %1447 = vmatprep.subr.mxu0 0.0
        %1448 = vmatpush1.msra.mxu0 0.0
        %1449 = vmatprep.subr.mxu0 0.0
        %1450 = vmatpush1.msra.mxu0 0.0
        %1451 = vmatprep.subr.mxu0 0.0
        %1452 = vmatpush1.msra.mxu0 0.0
        %1453 = vmatprep.subr.mxu0 0.0
        %1454 = vmatpush1.msra.mxu0 0.0
        %1455 = vmatprep.subr.mxu0 0.0
        %1456 = vmatpush1.msra.mxu0 0.0
        %1457 = vmatprep.subr.mxu0 0.0
        %1458 = vmatpush1.msra.mxu0 0.0
        %1459 = vmatprep.subr.mxu0 0.0
        %1460 = vmatpush1.msra.mxu0 0.0
        %1461 = vmatprep.subr.mxu0 0.0
        %1462 = vmatpush1.msra.mxu0 0.0
        %1463 = vmatprep.subr.mxu0 0.0
        %1464 = vmatpush1.msra.mxu0 0.0
        %1465 = vmatprep.subr.mxu0 0.0
        %1466 = vmatpush1.msra.mxu0 0.0
        %1467 = vmatprep.subr.mxu0 0.0
        %1468 = vmatpush1.msra.mxu0 0.0
        %1469 = vmatprep.subr.mxu0 0.0
        %1470 = vmatpush1.msra.mxu0 0.0
        %1471 = vmatprep.subr.mxu0 0.0
        %1472 = vmatpush1.msra.mxu0 0.0
        %1473 = vmatprep.subr.mxu0 0.0
        %1474 = vmatpush1.msra.mxu0 0.0
        %1475 = vmatprep.subr.mxu0 0.0
        %1476 = vmatpush1.msra.mxu0 0.0
        %1477 = vmatprep.subr.mxu0 0.0
        %1478 = vmatpush1.msra.mxu0 0.0
        %1479 = vmatprep.subr.mxu0 0.0
        %1480 = vmatpush1.msra.mxu0 0.0
        %1481 = vmatprep.subr.mxu0 0.0
        %1482 = vmatpush1.msra.mxu0 0.0
        %1483 = vmatprep.subr.mxu0 0.0
        %1484 = vmatpush1.msra.mxu0 0.0
        %1485 = vmatprep.subr.mxu0 0.0
        %1486 = vmatpush1.msra.mxu0 0.0
        %1487 = vmatprep.subr.mxu0 0.0
        %1488 = vmatpush1.msra.mxu0 0.0
        %1489 = vmatprep.subr.mxu0 0.0
        %1490 = vmatpush1.msra.mxu0 0.0
        %1491 = vmatprep.subr.mxu0 0.0
        %1492 = vmatpush1.msra.mxu0 0.0
        %1493 = vmatprep.subr.mxu0 0.0
        %1494 = vmatpush1.msra.mxu0 0.0
        %1495 = vmatprep.subr.mxu0 0.0
        %1496 = vmatpush1.msra.mxu0 0.0
        %1497 = vmatprep.subr.mxu0 0.0
        %1498 = vmatpush1.msra.mxu0 0.0
        %1499 = vmatprep.subr.mxu0 0.0
        %1500 = vmatpush1.msra.mxu0 0.0
        %1501 = vmatprep.subr.mxu0 0.0
        %1502 = vmatpush1.msra.mxu0 0.0
        %1503 = vmatprep.mubr.f32.mxu0 0.0
        %1504 = vmatmul.mubr.f32.gmra.mrb[0].mxu0 %v1437
        %v1505 = vpop.f32.mrb[0].mxu0
        %v1506 = vadd.f32 %v1434, %v1505
        %v1507 = vpop.f32.mrb[0].mxu0
        %1508 = vdwg.mxu0
        %v1509 = vadd.f32 %v1506, %v323
        %v1510 = vsel %vm335, %v1509, 0.0
        %1511 = vadd.xlane.f32.xlu0 %v1510
        %v1512 = vpop.xlane.xlu0 %1511
        %v1513 = vrcp.pop 32.0
        %v1514 = vmul.f32 %v1512, %v1513
        %v1515 = vmul.f32 %v1509, %v1509
        %v1516 = vsel %vm335, %v1515, 0.0
        %1517 = vadd.xlane.f32.xlu0 %v1516
        %v1518 = vpop.xlane.xlu0 %1517
        %v1519 = vmul.f32 %v1518, %v1513
        %v1520 = vmul.f32 %v1514, %v1514
        %v1521 = vsub.f32 %v1519, %v1520
        %v1522 = vsub.f32 %v1509, %v1514
        %v1523 = vadd.f32 %v1521, 1e-05
        %v1524 = vrsqrt.pop %v1523
        %v1525 = vmul.f32 %v1522, %v1524
        %v1526 = vld [vmem:[%s5] sm:$0x1]
        %v1528 = vlaneseq
        %v1529 = vshrl.u32 %v1528, 7
        %v1530 = vsub.s32 0, %v1529
        %v1531 = vrot.slane %v1526, %v1530
        %v1533 = vmul.f32 %v1525, %v1531
        %v1534 = vld [vmem:[%s6] sm:$0x1]
        %v1536 = vlaneseq
        %v1537 = vshrl.u32 %v1536, 7
        %v1538 = vsub.s32 0, %v1537
        %v1539 = vrot.slane %v1534, %v1538
        %v1541 = vadd.f32 %v1533, %v1539
        %1542 = vst.msk [vmem:[%s322] sm:$0xff] %vm335, %v1541
        %s1543 = sand.u32 %s185, 1
        %s1544 = scalar_lea.sflag [#allocation10], %s1543
        %s1545 = sand.u32 %s185, 1
        %s1546 = smul.addr %s1545, 8
        %s1547 = scalar_lea.vmem [#allocation14], %s1546
        // Predicated region
        $region61: #{tpu_custom_call.1} parent=47 // pred_check
          %p1548 = pneg %p195
        $region62: #{tpu_custom_call.1} parent=47 // pred_check_branch
          %1550 = sbr.rel (%p1548) target = $region64
        $region63: #{tpu_custom_call.1} parent=47 // pred_region
          %s1552 = ssub.s32 128, 128
          %1553 = vsyncadd %s1544, %s1552
          %s1554 = smul.addr %s25, 128
          %s1555 = scalar_lea.hbm %s7, %s1554
          %s1557 = sshll.u32 %s1547, 4
          %s1558 = int_to_ptr.vmem [resolvable:$true] %s1557
          %1560 = dma.vmem_to_hbm [thread:$0]  %s1558, 128, %s1555, %s1544
        $region64: #{tpu_custom_call.1} parent=47 // pred_fallthru
          _
      $region48: #{tpu_custom_call.1} parent=5 // pred_fallthru
        _
      %p1561 = scmp.le.s32.totalorder 2, %s20
      // Predicated region
      $region65: #{tpu_custom_call.1} parent=5 // pred_check
        %p1562 = pneg %p1561
      $region66: #{tpu_custom_call.1} parent=5 // pred_check_branch
        %1564 = sbr.rel (%p1562) target = $region68
      $region67: #{tpu_custom_call.1} parent=5 // pred_region
        %s1565 = ssub.s32 %s20, 2
        // Predicated region
        $region69: #{tpu_custom_call.1} parent=67 // pred_check
          %p1566 = pneg %p201
        $region70: #{tpu_custom_call.1} parent=67 // pred_check_branch
          %1568 = sbr.rel (%p1566) target = $region72
        $region71: #{tpu_custom_call.1} parent=67 // pred_region
          %s1569 = sand.u32 %s186, 1
          %s1570 = scalar_lea.sflag [#allocation10], %s1569
          %s1571 = sand.u32 %s186, 1
          %s1572 = smul.addr %s1571, 8
          %s1573 = scalar_lea.vmem [#allocation14], %s1572
          %1574 = dma.done %s1570, 128
        $region72: #{tpu_custom_call.1} parent=67 // pred_fallthru
          _
      $region68: #{tpu_custom_call.1} parent=5 // pred_fallthru
        _
    $region6: #{tpu_custom_call.1} parent=1 // loop_footer
      %s24 = sadd.s32 1, %s20
    $region7: #{tpu_custom_call.1} parent=1 // loop_footer_branch
      %19 = sbr.rel target = $region3
    $region8: #{tpu_custom_call.1} parent=1 // loop_exit
      _
    %1575 = vsyncpa [#allocation9], 1
    %s1576 = scalar_lea.sflag [#allocation9], 1
    %1577 = vsyncpa %s1576, 1
    %1578 = vsyncpa [#allocation12], 1
    %1579 = vsyncpa [#allocation10], 1
    %s1580 = scalar_lea.sflag [#allocation10], 1
    %1581 = vsyncpa %s1580, 1

</llo_original>
